<compile_context>
chip_gen: v7x
topology: tpu7x:2x2x1
jax: 0.10.0
libtpu: 0.0.40
codegen_flags: <defaults>
</compile_context>

<pallas_src>
import jax
import jax.numpy as jnp
from jax.experimental import pallas as pl
from jax.experimental.pallas import tpu as pltpu

EMB = 32  # embedding size fixed by the module (Linear(..., 32), fc Linear(32*32, 1))


def _round_up(x, m):
    return ((x + m - 1) // m) * m


def mlp_kernel(uidx_ref, iidx_ref,              # scalar-prefetch (SMEM): user/item row ids
               um_ref, im_ref,                  # embedding matrices, left in HBM (pl.ANY)
               uw_ref, ub_ref, iw_ref, ib_ref,  # userFC / itemFC weights (VMEM resident)
               eu_ref, ev_ref,                  # (32, 1024) 0/1 expansion matrices
               fw_ref,                          # (1, 1024) fc weight (NCHW flatten order)
               sc_ref,                          # SMEM scalars: [conv_w, conv_b, fc_b]
               out_ref,                         # (TILE_B, 1) output block
               ubuf, ibuf, sem):                # VMEM gather buffers + DMA semaphores
    tile_b = ubuf.shape[0]
    base = pl.program_id(0) * tile_b

    # ---- in-kernel embedding-row gather: issue all row DMAs, then drain ----------
    def issue(r, carry):
        pltpu.make_async_copy(um_ref.at[uidx_ref[base + r]], ubuf.at[r], sem.at[0]).start()
        pltpu.make_async_copy(im_ref.at[iidx_ref[base + r]], ibuf.at[r], sem.at[1]).start()
        return carry
    jax.lax.fori_loop(0, tile_b, issue, 0)

    def drain(r, carry):
        # Dummy src index: only the (shape, sem) of the descriptor matter for wait().
        pltpu.make_async_copy(um_ref.at[0], ubuf.at[r], sem.at[0]).wait()
        pltpu.make_async_copy(im_ref.at[0], ibuf.at[r], sem.at[1]).wait()
        return carry
    jax.lax.fori_loop(0, tile_b, drain, 0)

    cw = sc_ref[0]
    cb = sc_ref[1]
    fb = sc_ref[2]

    # ---- userFC / itemFC (MXU); fold the 1x1-conv scale into the user vector -----
    u = (jnp.dot(ubuf[...], uw_ref[...], preferred_element_type=jnp.float32)
         + ub_ref[...]) * cw                                            # (TILE_B, 32)
    v = jnp.dot(ibuf[...], iw_ref[...],
                preferred_element_type=jnp.float32) + ib_ref[...]       # (TILE_B, 32)

    # ---- lane-dense outer product: inter[b, i*32+j] = u[b,i] * v[b,j] ------------
    # u @ E_u repeats each u element 32x along lanes, v @ E_v tiles v 32x.
    u_rep = jnp.dot(u, eu_ref[...], preferred_element_type=jnp.float32)  # (TILE_B, 1024)
    v_til = jnp.dot(v, ev_ref[...], preferred_element_type=jnp.float32)  # (TILE_B, 1024)

    # Conv2d(1,1,1) (scale already applied) + bias + ReLU on full 128-lane vregs.
    feat = jnp.maximum(u_rep * v_til + cb, 0.0)                          # (TILE_B, 1024)

    # Flatten + Linear(1024, 1): weighted single lane reduction.
    pred = jnp.sum(feat * fw_ref[...], axis=1, keepdims=True) + fb       # (TILE_B, 1)
    out_ref[...] = jax.nn.sigmoid(pred)


def mlp_forward(user_idx, item_idx, params, *, tile_b=256):
    um = params["userMatrix"].astype(jnp.float32)          # (nUsers, nItems)
    im = params["itemMatrix"].astype(jnp.float32)          # (nItems, nUsers)
    nUsers, nItems = um.shape
    assert im.shape == (nItems, nUsers)
    B = int(user_idx.shape[0])

    # Parameter prep (cheap glue, done once per call).
    uw = params["userFC_w"].T.astype(jnp.float32)           # (nItems, 32)
    ub = params["userFC_b"].astype(jnp.float32)[None, :]    # (1, 32)
    iw = params["itemFC_w"].T.astype(jnp.float32)           # (nUsers, 32)
    ib = params["itemFC_b"].astype(jnp.float32)[None, :]    # (1, 32)
    fw = params["fc_w"].reshape(1, EMB * EMB).astype(jnp.float32)  # NCHW flatten order
    scalars = jnp.stack([params["conv_w"].reshape(()),
                         params["conv_b"].reshape(()),
                         params["fc_b"].reshape(())]).astype(jnp.float32)  # (3,) -> SMEM

    # 0/1 expansion matrices: eu[i, i*32+j] = 1, ev[j, i*32+j] = 1.
    kk = jnp.arange(EMB * EMB, dtype=jnp.int32)[None, :]
    rr = jnp.arange(EMB, dtype=jnp.int32)[:, None]
    eu = (kk // EMB == rr).astype(jnp.float32)               # (32, 1024)
    ev = (kk % EMB == rr).astype(jnp.float32)                # (32, 1024)

    # Generation-aware tile sizing: keep residents + gather buffers well under the
    # v7x scoped-VMEM default (32 MiB); v5e/v6e have more headroom.
    bytes_per_row = 4 * (nItems + nUsers)
    resident_bytes = 2 * 4 * (uw.size + ub.size + iw.size + ib.size
                              + eu.size + ev.size + fw.size)  # x2: double buffering
    budget = 20 * 1024 * 1024
    max_rows = max(8, int((budget - resident_bytes) // bytes_per_row))
    tile_b = max(8, min(int(tile_b), (max_rows // 8) * 8))
    tile_b = min(tile_b, _round_up(B, 8))

    b_pad = _round_up(B, tile_b)
    n_tiles = b_pad // tile_b
    uidx = jnp.pad(user_idx.astype(jnp.int32), (0, b_pad - B))   # pad -> row 0 (valid)
    iidx = jnp.pad(item_idx.astype(jnp.int32), (0, b_pad - B))

    grid_spec = pltpu.PrefetchScalarGridSpec(
        num_scalar_prefetch=2,                   # uidx, iidx land in SMEM
        grid=(n_tiles,),
        in_specs=[
            pl.BlockSpec(memory_space=pl.ANY),                        # userMatrix (HBM)
            pl.BlockSpec(memory_space=pl.ANY),                        # itemMatrix (HBM)
            pl.BlockSpec((nItems, EMB), lambda b, ui, ii: (0, 0)),    # uw (resident)
            pl.BlockSpec((1, EMB), lambda b, ui, ii: (0, 0)),         # ub
            pl.BlockSpec((nUsers, EMB), lambda b, ui, ii: (0, 0)),    # iw
            pl.BlockSpec((1, EMB), lambda b, ui, ii: (0, 0)),         # ib
            pl.BlockSpec((EMB, EMB * EMB), lambda b, ui, ii: (0, 0)),  # eu
            pl.BlockSpec((EMB, EMB * EMB), lambda b, ui, ii: (0, 0)),  # ev
            pl.BlockSpec((1, EMB * EMB), lambda b, ui, ii: (0, 0)),    # fw
            pl.BlockSpec(memory_space=pltpu.MemorySpace.SMEM),         # [cw, cb, fb]
        ],
        out_specs=pl.BlockSpec((tile_b, 1), lambda b, ui, ii: (b, 0)),
        scratch_shapes=[
            pltpu.VMEM((tile_b, nItems), jnp.float32),  # gathered user rows
            pltpu.VMEM((tile_b, nUsers), jnp.float32),  # gathered item rows
            pltpu.SemaphoreType.DMA((2,)),              # one sem per gather stream
        ],
    )

    out = pl.pallas_call(
        mlp_kernel,
        grid_spec=grid_spec,
        out_shape=jax.ShapeDtypeStruct((b_pad, 1), jnp.float32),
        compiler_params=pltpu.CompilerParams(
            dimension_semantics=("parallel",),        # megacore split on v7x
            vmem_limit_bytes=32 * 1024 * 1024,
        ),
    )(uidx, iidx, um, im, uw, ub, iw, ib, eu, ev, fw, scalars)

    return out[:B, 0]                                   # (B,)


def mlp_reference(user_idx, item_idx, params):
    # Pure-JAX mirror of the PyTorch forward.
    u_in = params["userMatrix"][user_idx]
    i_in = params["itemMatrix"][item_idx]
    u = u_in @ params["userFC_w"].T + params["userFC_b"]
    v = i_in @ params["itemFC_w"].T + params["itemFC_b"]
    inter = u[:, :, None] * v[:, None, :]
    feat = jnp.maximum(params["conv_w"][0] * inter + params["conv_b"][0], 0.0)
    flat = feat.reshape(-1, EMB * EMB)
    pred = flat @ params["fc_w"].T + params["fc_b"]
    return jax.nn.sigmoid(pred[:, 0])


if __name__ == "__main__":
    nUsers, nItems, B = 48, 64, 8

    key = jax.random.PRNGKey(0)
    ks = jax.random.split(key, 10)

    def uinit(k, shape, fan_in):
        bound = 1.0 / float(fan_in) ** 0.5
        return jax.random.uniform(k, shape, jnp.float32, -bound, bound)

    params = {
        "userMatrix": jax.random.normal(ks[0], (nUsers, nItems), jnp.float32),
        "itemMatrix": jax.random.normal(ks[1], (nItems, nUsers), jnp.float32),
        "userFC_w": uinit(ks[2], (EMB, nItems), nItems),   # Linear(nItems, 32)
        "userFC_b": uinit(ks[3], (EMB,), nItems),
        "itemFC_w": uinit(ks[4], (EMB, nUsers), nUsers),   # Linear(nUsers, 32)
        "itemFC_b": uinit(ks[5], (EMB,), nUsers),
        "conv_w": uinit(ks[6], (1,), 1),                   # Conv2d(1,1,1) weight -> scalar
        "conv_b": uinit(ks[7], (1,), 1),
        "fc_w": uinit(ks[8], (1, EMB * EMB), EMB * EMB),   # Linear(1024, 1)
        "fc_b": uinit(ks[9], (1,), EMB * EMB),
    }

    user = jax.random.randint(jax.random.PRNGKey(1), (B,), 0, nUsers)
    item = jax.random.randint(jax.random.PRNGKey(2), (B,), 0, nItems)

    pred = jax.block_until_ready(mlp_forward(user, item, params))
    ref = mlp_reference(user, item, params)

    assert pred.shape == (B,)
    assert jnp.allclose(pred, ref, atol=2e-5, rtol=2e-5), (pred, ref)
    print("KERNEL_OK")
</pallas_src>

<mosaic_0001>
module attributes {stable_mosaic.version = 11 : i64} {
  func.func @mlp_kernel(%arg0: i32, %arg1: memref<8xi32, #tpu.memory_space<smem>>, %arg2: memref<8xi32, #tpu.memory_space<smem>>, %arg3: memref<48x64xf32, #tpu.memory_space<any>>, %arg4: memref<64x48xf32, #tpu.memory_space<any>>, %arg5: memref<64x32xf32, #tpu.memory_space<vmem>>, %arg6: memref<1x32xf32, #tpu.memory_space<vmem>>, %arg7: memref<48x32xf32, #tpu.memory_space<vmem>>, %arg8: memref<1x32xf32, #tpu.memory_space<vmem>>, %arg9: memref<32x1024xf32, #tpu.memory_space<vmem>>, %arg10: memref<32x1024xf32, #tpu.memory_space<vmem>>, %arg11: memref<1x1024xf32, #tpu.memory_space<vmem>>, %arg12: memref<3xf32, #tpu.memory_space<smem>>, %arg13: memref<8x1xf32, #tpu.memory_space<vmem>>, %arg14: memref<8x64xf32, #tpu.memory_space<vmem>>, %arg15: memref<8x48xf32, #tpu.memory_space<vmem>>, %arg16: memref<2x!tpu.dma_semaphore, #tpu.memory_space<semaphore_mem>>) attributes {dimension_semantics = [#tpu.dimension_semantics<parallel>], iteration_bounds = array<i64: 1>, scalar_prefetch = 2 : i64, scratch_operands = 3 : i64, tpu.core_type = #tpu.core_type<tc>, window_params = [{}, {}, {pipeline_mode = #tpu.pipeline_mode<synchronous>, transform_indices = @transform_2, window_bounds = array<i64: 64, 32>}, {pipeline_mode = #tpu.pipeline_mode<synchronous>, transform_indices = @transform_3, window_bounds = array<i64: 1, 32>}, {pipeline_mode = #tpu.pipeline_mode<synchronous>, transform_indices = @transform_4, window_bounds = array<i64: 48, 32>}, {pipeline_mode = #tpu.pipeline_mode<synchronous>, transform_indices = @transform_5, window_bounds = array<i64: 1, 32>}, {pipeline_mode = #tpu.pipeline_mode<synchronous>, transform_indices = @transform_6, window_bounds = array<i64: 32, 1024>}, {pipeline_mode = #tpu.pipeline_mode<synchronous>, transform_indices = @transform_7, window_bounds = array<i64: 32, 1024>}, {pipeline_mode = #tpu.pipeline_mode<synchronous>, transform_indices = @transform_8, window_bounds = array<i64: 1, 1024>}, {transform_indices = @transform_9, window_bounds = array<i64: 3>}, {transform_indices = @transform_10, window_bounds = array<i64: 8, 1>}]} {
    %c8_i32 = arith.constant 8 : i32
    %0 = arith.muli %arg0, %c8_i32 : i32
    %c0_i32 = arith.constant 0 : i32
    %c8_i32_0 = arith.constant 8 : i32
    %1 = arith.addi %c0_i32, %c8_i32_0 : i32
    %c1_i32 = arith.constant 1 : i32
    scf.for %arg17 = %c0_i32 to %1 step %c1_i32  : i32 {
      %42 = arith.addi %0, %arg17 : i32
      %43 = arith.index_cast %42 : i32 to index
      %44 = memref.load %arg1[%43] : memref<8xi32, #tpu.memory_space<smem>>
      %c0_i32_32 = arith.constant 0 : i32
      %c0_i32_33 = arith.constant 0 : i32
      %45 = tpu.memref_slice %arg3[%44, %c0_i32_33] : memref<48x64xf32, #tpu.memory_space<any>> -> memref<1x64xf32, #tpu.memory_space<any>>
      %46 = tpu.memref_squeeze %45 : memref<1x64xf32, #tpu.memory_space<any>> -> memref<64xf32, #tpu.memory_space<any>>
      %c0_i32_34 = arith.constant 0 : i32
      %47 = tpu.memref_slice %arg14[%arg17, %c0_i32_34] : memref<8x64xf32, #tpu.memory_space<vmem>> -> memref<1x64xf32, #tpu.memory_space<vmem>>
      %48 = tpu.memref_squeeze %47 : memref<1x64xf32, #tpu.memory_space<vmem>> -> memref<64xf32, #tpu.memory_space<vmem>>
      %49 = tpu.memref_slice %arg16[%c0_i32_32] : memref<2x!tpu.dma_semaphore, #tpu.memory_space<semaphore_mem>> -> memref<1x!tpu.dma_semaphore, #tpu.memory_space<semaphore_mem>>
      %50 = tpu.memref_squeeze %49 : memref<1x!tpu.dma_semaphore, #tpu.memory_space<semaphore_mem>> -> memref<!tpu.dma_semaphore, #tpu.memory_space<semaphore_mem>>
      tpu.enqueue_dma source(%46 : memref<64xf32, #tpu.memory_space<any>>) target(%48 : memref<64xf32, #tpu.memory_space<vmem>>) target_semaphore(%50 : memref<!tpu.dma_semaphore, #tpu.memory_space<semaphore_mem>>)
      %51 = arith.addi %0, %arg17 : i32
      %52 = arith.index_cast %51 : i32 to index
      %53 = memref.load %arg2[%52] : memref<8xi32, #tpu.memory_space<smem>>
      %c1_i32_35 = arith.constant 1 : i32
      %c0_i32_36 = arith.constant 0 : i32
      %54 = tpu.memref_slice %arg4[%53, %c0_i32_36] : memref<64x48xf32, #tpu.memory_space<any>> -> memref<1x48xf32, #tpu.memory_space<any>>
      %55 = tpu.memref_squeeze %54 : memref<1x48xf32, #tpu.memory_space<any>> -> memref<48xf32, #tpu.memory_space<any>>
      %c0_i32_37 = arith.constant 0 : i32
      %56 = tpu.memref_slice %arg15[%arg17, %c0_i32_37] : memref<8x48xf32, #tpu.memory_space<vmem>> -> memref<1x48xf32, #tpu.memory_space<vmem>>
      %57 = tpu.memref_squeeze %56 : memref<1x48xf32, #tpu.memory_space<vmem>> -> memref<48xf32, #tpu.memory_space<vmem>>
      %58 = tpu.memref_slice %arg16[%c1_i32_35] : memref<2x!tpu.dma_semaphore, #tpu.memory_space<semaphore_mem>> -> memref<1x!tpu.dma_semaphore, #tpu.memory_space<semaphore_mem>>
      %59 = tpu.memref_squeeze %58 : memref<1x!tpu.dma_semaphore, #tpu.memory_space<semaphore_mem>> -> memref<!tpu.dma_semaphore, #tpu.memory_space<semaphore_mem>>
      tpu.enqueue_dma source(%55 : memref<48xf32, #tpu.memory_space<any>>) target(%57 : memref<48xf32, #tpu.memory_space<vmem>>) target_semaphore(%59 : memref<!tpu.dma_semaphore, #tpu.memory_space<semaphore_mem>>)
    }
    %c8_i32_1 = arith.constant 8 : i32
    %c0_i32_2 = arith.constant 0 : i32
    %c8_i32_3 = arith.constant 8 : i32
    %2 = arith.addi %c0_i32_2, %c8_i32_3 : i32
    %c1_i32_4 = arith.constant 1 : i32
    scf.for %arg17 = %c0_i32_2 to %2 step %c1_i32_4  : i32 {
      %c0_i32_32 = arith.constant 0 : i32
      %c0_i32_33 = arith.constant 0 : i32
      %c0_i32_34 = arith.constant 0 : i32
      %42 = tpu.memref_slice %arg3[%c0_i32_32, %c0_i32_34] : memref<48x64xf32, #tpu.memory_space<any>> -> memref<1x64xf32, #tpu.memory_space<any>>
      %43 = tpu.memref_squeeze %42 : memref<1x64xf32, #tpu.memory_space<any>> -> memref<64xf32, #tpu.memory_space<any>>
      %c0_i32_35 = arith.constant 0 : i32
      %44 = tpu.memref_slice %arg14[%arg17, %c0_i32_35] : memref<8x64xf32, #tpu.memory_space<vmem>> -> memref<1x64xf32, #tpu.memory_space<vmem>>
      %45 = tpu.memref_squeeze %44 : memref<1x64xf32, #tpu.memory_space<vmem>> -> memref<64xf32, #tpu.memory_space<vmem>>
      %46 = tpu.memref_slice %arg16[%c0_i32_33] : memref<2x!tpu.dma_semaphore, #tpu.memory_space<semaphore_mem>> -> memref<1x!tpu.dma_semaphore, #tpu.memory_space<semaphore_mem>>
      %47 = tpu.memref_squeeze %46 : memref<1x!tpu.dma_semaphore, #tpu.memory_space<semaphore_mem>> -> memref<!tpu.dma_semaphore, #tpu.memory_space<semaphore_mem>>
      tpu.wait_dma2 semaphore(%47 : memref<!tpu.dma_semaphore, #tpu.memory_space<semaphore_mem>>) src(%43 : memref<64xf32, #tpu.memory_space<any>>) dst(%45 : memref<64xf32, #tpu.memory_space<vmem>>)
      %c0_i32_36 = arith.constant 0 : i32
      %c1_i32_37 = arith.constant 1 : i32
      %c0_i32_38 = arith.constant 0 : i32
      %48 = tpu.memref_slice %arg4[%c0_i32_36, %c0_i32_38] : memref<64x48xf32, #tpu.memory_space<any>> -> memref<1x48xf32, #tpu.memory_space<any>>
      %49 = tpu.memref_squeeze %48 : memref<1x48xf32, #tpu.memory_space<any>> -> memref<48xf32, #tpu.memory_space<any>>
      %c0_i32_39 = arith.constant 0 : i32
      %50 = tpu.memref_slice %arg15[%arg17, %c0_i32_39] : memref<8x48xf32, #tpu.memory_space<vmem>> -> memref<1x48xf32, #tpu.memory_space<vmem>>
      %51 = tpu.memref_squeeze %50 : memref<1x48xf32, #tpu.memory_space<vmem>> -> memref<48xf32, #tpu.memory_space<vmem>>
      %52 = tpu.memref_slice %arg16[%c1_i32_37] : memref<2x!tpu.dma_semaphore, #tpu.memory_space<semaphore_mem>> -> memref<1x!tpu.dma_semaphore, #tpu.memory_space<semaphore_mem>>
      %53 = tpu.memref_squeeze %52 : memref<1x!tpu.dma_semaphore, #tpu.memory_space<semaphore_mem>> -> memref<!tpu.dma_semaphore, #tpu.memory_space<semaphore_mem>>
      tpu.wait_dma2 semaphore(%53 : memref<!tpu.dma_semaphore, #tpu.memory_space<semaphore_mem>>) src(%49 : memref<48xf32, #tpu.memory_space<any>>) dst(%51 : memref<48xf32, #tpu.memory_space<vmem>>)
    }
    %c8_i32_5 = arith.constant 8 : i32
    %c0 = arith.constant 0 : index
    %3 = memref.load %arg12[%c0] : memref<3xf32, #tpu.memory_space<smem>>
    %c1 = arith.constant 1 : index
    %4 = memref.load %arg12[%c1] : memref<3xf32, #tpu.memory_space<smem>>
    %c2 = arith.constant 2 : index
    %5 = memref.load %arg12[%c2] : memref<3xf32, #tpu.memory_space<smem>>
    %c0_6 = arith.constant 0 : index
    %c0_7 = arith.constant 0 : index
    %6 = vector.load %arg14[%c0_6, %c0_7] : memref<8x64xf32, #tpu.memory_space<vmem>>, vector<8x64xf32>
    %c0_8 = arith.constant 0 : index
    %c0_9 = arith.constant 0 : index
    %7 = vector.load %arg5[%c0_8, %c0_9] : memref<64x32xf32, #tpu.memory_space<vmem>>, vector<64x32xf32>
    %cst = arith.constant dense<0.000000e+00> : vector<8x32xf32>
    %8 = tpu.matmul %6, %7, %cst {dimension_numbers = #tpu.dot_dimension_numbers<[1], [0], [0], [1], [0, 0, 1, 1], [], []>} : vector<8x64xf32>, vector<64x32xf32>, vector<8x32xf32> -> vector<8x32xf32>
    %c0_10 = arith.constant 0 : index
    %c0_11 = arith.constant 0 : index
    %9 = vector.load %arg6[%c0_10, %c0_11] : memref<1x32xf32, #tpu.memory_space<vmem>>, vector<1x32xf32>
    %10 = vector.broadcast %9 : vector<1x32xf32> to vector<8x32xf32>
    %11 = arith.addf %8, %10 : vector<8x32xf32>
    %12 = vector.broadcast %3 : f32 to vector<8x32xf32>
    %13 = arith.mulf %11, %12 : vector<8x32xf32>
    %c0_12 = arith.constant 0 : index
    %c0_13 = arith.constant 0 : index
    %14 = vector.load %arg15[%c0_12, %c0_13] : memref<8x48xf32, #tpu.memory_space<vmem>>, vector<8x48xf32>
    %c0_14 = arith.constant 0 : index
    %c0_15 = arith.constant 0 : index
    %15 = vector.load %arg7[%c0_14, %c0_15] : memref<48x32xf32, #tpu.memory_space<vmem>>, vector<48x32xf32>
    %cst_16 = arith.constant dense<0.000000e+00> : vector<8x32xf32>
    %16 = tpu.matmul %14, %15, %cst_16 {dimension_numbers = #tpu.dot_dimension_numbers<[1], [0], [0], [1], [0, 0, 1, 1], [], []>} : vector<8x48xf32>, vector<48x32xf32>, vector<8x32xf32> -> vector<8x32xf32>
    %c0_17 = arith.constant 0 : index
    %c0_18 = arith.constant 0 : index
    %17 = vector.load %arg8[%c0_17, %c0_18] : memref<1x32xf32, #tpu.memory_space<vmem>>, vector<1x32xf32>
    %18 = vector.broadcast %17 : vector<1x32xf32> to vector<8x32xf32>
    %19 = arith.addf %16, %18 : vector<8x32xf32>
    %c0_19 = arith.constant 0 : index
    %c0_20 = arith.constant 0 : index
    %20 = vector.load %arg9[%c0_19, %c0_20] : memref<32x1024xf32, #tpu.memory_space<vmem>>, vector<32x1024xf32>
    %cst_21 = arith.constant dense<0.000000e+00> : vector<8x1024xf32>
    %21 = tpu.matmul %13, %20, %cst_21 {dimension_numbers = #tpu.dot_dimension_numbers<[1], [0], [0], [1], [0, 0, 1, 1], [], []>} : vector<8x32xf32>, vector<32x1024xf32>, vector<8x1024xf32> -> vector<8x1024xf32>
    %c0_22 = arith.constant 0 : index
    %c0_23 = arith.constant 0 : index
    %22 = vector.load %arg10[%c0_22, %c0_23] : memref<32x1024xf32, #tpu.memory_space<vmem>>, vector<32x1024xf32>
    %cst_24 = arith.constant dense<0.000000e+00> : vector<8x1024xf32>
    %23 = tpu.matmul %19, %22, %cst_24 {dimension_numbers = #tpu.dot_dimension_numbers<[1], [0], [0], [1], [0, 0, 1, 1], [], []>} : vector<8x32xf32>, vector<32x1024xf32>, vector<8x1024xf32> -> vector<8x1024xf32>
    %24 = arith.mulf %21, %23 : vector<8x1024xf32>
    %25 = vector.broadcast %4 : f32 to vector<8x1024xf32>
    %26 = arith.addf %24, %25 : vector<8x1024xf32>
    %cst_25 = arith.constant 0.000000e+00 : f32
    %27 = vector.broadcast %cst_25 : f32 to vector<8x1024xf32>
    %28 = arith.maximumf %26, %27 : vector<8x1024xf32>
    %c0_26 = arith.constant 0 : index
    %c0_27 = arith.constant 0 : index
    %29 = vector.load %arg11[%c0_26, %c0_27] : memref<1x1024xf32, #tpu.memory_space<vmem>>, vector<1x1024xf32>
    %30 = vector.broadcast %29 : vector<1x1024xf32> to vector<8x1024xf32>
    %31 = arith.mulf %28, %30 : vector<8x1024xf32>
    %cst_28 = arith.constant dense<0.000000e+00> : vector<8xf32>
    %32 = vector.multi_reduction <add>, %31, %cst_28 [1] : vector<8x1024xf32> to vector<8xf32>
    %33 = vector.shape_cast %32 : vector<8xf32> to vector<8x1xf32>
    %34 = vector.broadcast %5 : f32 to vector<8x1xf32>
    %35 = arith.addf %33, %34 : vector<8x1xf32>
    %36 = arith.negf %35 : vector<8x1xf32>
    %37 = math.exp %36 : vector<8x1xf32>
    %cst_29 = arith.constant 1.000000e+00 : f32
    %38 = vector.broadcast %cst_29 : f32 to vector<8x1xf32>
    %39 = arith.addf %38, %37 : vector<8x1xf32>
    %40 = arith.divf %38, %39 : vector<8x1xf32>
    %c0_30 = arith.constant 0 : index
    %c0_31 = arith.constant 0 : index
    %41 = vector.load %arg13[%c0_30, %c0_31] : memref<8x1xf32, #tpu.memory_space<vmem>>, vector<8x1xf32>
    tpu.vector_store %arg13[%c0_30, %c0_31], %40 {strides = array<i32>} : memref<8x1xf32, #tpu.memory_space<vmem>>, vector<8x1xf32>,
    return
  }
  func.func @transform_2(%arg0: i32, %arg1: memref<8xi32, #tpu.memory_space<smem>>, %arg2: memref<8xi32, #tpu.memory_space<smem>>) -> (i32, i32) {
    %c0_i32 = arith.constant 0 : i32
    %c0_i32_0 = arith.constant 0 : i32
    %c0_i32_1 = arith.constant 0 : i32
    return %c0_i32, %c0_i32_0 : i32, i32
  }
  func.func @transform_3(%arg0: i32, %arg1: memref<8xi32, #tpu.memory_space<smem>>, %arg2: memref<8xi32, #tpu.memory_space<smem>>) -> (i32, i32) {
    %c0_i32 = arith.constant 0 : i32
    %c0_i32_0 = arith.constant 0 : i32
    %c0_i32_1 = arith.constant 0 : i32
    return %c0_i32, %c0_i32_0 : i32, i32
  }
  func.func @transform_4(%arg0: i32, %arg1: memref<8xi32, #tpu.memory_space<smem>>, %arg2: memref<8xi32, #tpu.memory_space<smem>>) -> (i32, i32) {
    %c0_i32 = arith.constant 0 : i32
    %c0_i32_0 = arith.constant 0 : i32
    %c0_i32_1 = arith.constant 0 : i32
    return %c0_i32, %c0_i32_0 : i32, i32
  }
  func.func @transform_5(%arg0: i32, %arg1: memref<8xi32, #tpu.memory_space<smem>>, %arg2: memref<8xi32, #tpu.memory_space<smem>>) -> (i32, i32) {
    %c0_i32 = arith.constant 0 : i32
    %c0_i32_0 = arith.constant 0 : i32
    %c0_i32_1 = arith.constant 0 : i32
    return %c0_i32, %c0_i32_0 : i32, i32
  }
  func.func @transform_6(%arg0: i32, %arg1: memref<8xi32, #tpu.memory_space<smem>>, %arg2: memref<8xi32, #tpu.memory_space<smem>>) -> (i32, i32) {
    %c0_i32 = arith.constant 0 : i32
    %c0_i32_0 = arith.constant 0 : i32
    %c0_i32_1 = arith.constant 0 : i32
    return %c0_i32, %c0_i32_0 : i32, i32
  }
  func.func @transform_7(%arg0: i32, %arg1: memref<8xi32, #tpu.memory_space<smem>>, %arg2: memref<8xi32, #tpu.memory_space<smem>>) -> (i32, i32) {
    %c0_i32 = arith.constant 0 : i32
    %c0_i32_0 = arith.constant 0 : i32
    %c0_i32_1 = arith.constant 0 : i32
    return %c0_i32, %c0_i32_0 : i32, i32
  }
  func.func @transform_8(%arg0: i32, %arg1: memref<8xi32, #tpu.memory_space<smem>>, %arg2: memref<8xi32, #tpu.memory_space<smem>>) -> (i32, i32) {
    %c0_i32 = arith.constant 0 : i32
    %c0_i32_0 = arith.constant 0 : i32
    %c0_i32_1 = arith.constant 0 : i32
    return %c0_i32, %c0_i32_0 : i32, i32
  }
  func.func @transform_9(%arg0: i32, %arg1: memref<8xi32, #tpu.memory_space<smem>>, %arg2: memref<8xi32, #tpu.memory_space<smem>>) -> i32 {
    %c0_i32 = arith.constant 0 : i32
    %c0_i32_0 = arith.constant 0 : i32
    return %c0_i32 : i32
  }
  func.func @transform_10(%arg0: i32, %arg1: memref<8xi32, #tpu.memory_space<smem>>, %arg2: memref<8xi32, #tpu.memory_space<smem>>) -> (i32, i32) {
    %c0_i32 = arith.constant 0 : i32
    %c0_i32_0 = arith.constant 0 : i32
    return %arg0, %c0_i32 : i32, i32
  }
}

</mosaic_0001>

<llo_original>
// kernel: tpu_custom_call.1
$region0: #{tpu_custom_call.1}
  #allocation0 [shape = 'u32[]', space=smem, size = 0x4, offset = 0x4, fixed_abs, tag = 'smem constant byte address 0x4 - core index']
  #allocation1 [shape = 'u32[144,128]{1,0:T(1,128)}', space=vmem, size = 0x12000, scoped, tag = 'internal scratch']
  #allocation2 [shape = 'f32[8,64]{1,0:T(8,128)}', space=vmem, size = 0x1000, scoped, tag = 'scratch operand']
  #allocation3 [shape = 'f32[8,48]{1,0:T(8,128)}', space=vmem, size = 0x1000, scoped, tag = 'scratch operand']
  #allocation4 [shape = 's32[2]{0}', space=sflag, size = 0x8, scoped, tag = 'scratch operand']
  #allocation5 [shape = 's32[1]{0}', space=sflag, size = 0x4, scoped, tag = 'scoped memory for tpu_custom_call.1']
  #allocation6 [shape = 'u8[512]{0}', space=smem, size = 0x200, scoped, tag = 'prefetched SMEM operand 0']
  #allocation7 [shape = 'u8[512]{0}', space=smem, size = 0x200, scoped, tag = 'prefetched SMEM operand 1']
  #allocation12 [shape = 's32[]', space=sflag, size = 0x4, offset = 0, fixed_abs, tag = 'sflag constant byte address 0x0 - dummy sync flag']
  #allocation13 [shape = 's32[]', space=sflag, size = 0x4, offset = 0, fixed_abs, tag = 'sflag constant byte address 0x0 - dummy sync flag']
  %s0 = inlined_call_operand.vmem [shape: s32[8], index: 0, kind: input, shape index: {}]
  %s1 = inlined_call_operand.vmem [shape: s32[8], index: 1, kind: input, shape index: {}]
  %s2 = inlined_call_operand.vmem [shape: f32[48,64], index: 2, kind: input, shape index: {}]
  %s3 = inlined_call_operand.vmem [shape: f32[64,48], index: 3, kind: input, shape index: {}]
  %s4 = inlined_call_operand.vmem [shape: f32[64,32], index: 4, kind: input, shape index: {}]
  %s5 = inlined_call_operand.vmem [shape: f32[1,32], index: 5, kind: input, shape index: {}]
  %s6 = inlined_call_operand.vmem [shape: f32[48,32], index: 6, kind: input, shape index: {}]
  %s7 = inlined_call_operand.vmem [shape: f32[1,32], index: 7, kind: input, shape index: {}]
  %s8 = inlined_call_operand.vmem [shape: f32[32,1024], index: 8, kind: input, shape index: {}]
  %s9 = inlined_call_operand.hbm [shape: f32[32,1024], index: 9, kind: input, shape index: {}]
  %s10 = inlined_call_operand.vmem [shape: f32[1,1024], index: 10, kind: input, shape index: {}]
  %s11 = inlined_call_operand.vmem [shape: f32[3], index: 11, kind: input, shape index: {}]
  %s12 = inlined_call_operand.vmem [shape: f32[8,1], index: 12, kind: output, shape index: {}]
  %s13 = sld [smem:[#allocation0]]
  $region124: #{tpu_custom_call.1} parent=0
    _
  %s15 = ssub.s32 1, %s13
  %s16 = scalar_select 0, %s15, %s13
  %s17 = sshll.u32 %s0, 4
  %s18 = int_to_ptr.vmem [resolvable:$true] %s17
  %20 = dma.vmem_to_smem %s18, 16, [#allocation6], [#allocation5]
  %s21 = sshll.u32 %s1, 4
  %s22 = int_to_ptr.vmem [resolvable:$true] %s21
  %24 = dma.vmem_to_smem %s22, 16, [#allocation7], [#allocation5]
  %25 = dma.done [#allocation5], 32
  %26 = sfence
  $region1: #{tpu_custom_call.1} parent=0
    #allocation8 [shape = 'u8[131072]{0}', space=vmem, size = 0x20000, scoped, tag = 'input window, operand 9, single buffered']
    #allocation9 [shape = 's32[1]{0}', space=sflag, size = 0x4, scoped, tag = 'scoped memory for tpu_custom_call.1']
    #allocation10 [shape = 's32[1]{0}', space=sflag, size = 0x4, scoped, tag = 'scoped memory for tpu_custom_call.1']
    #allocation11 [shape = 'u8[512]{0}', space=smem, size = 0x200, scoped, tag = 'input window, operand 11, single buffered']
    %27 = vsyncpa [#allocation9], 0
    %28 = vsyncpa [#allocation10], 0
    // Predicated region
    $region2: #{tpu_custom_call.1} parent=1 // pred_check
      _
    $region3: #{tpu_custom_call.1} parent=1 // pred_check_branch
      %30 = sbr.rel (0) target = $region5
    $region4: #{tpu_custom_call.1} parent=1 // pred_region
      _
    $region5: #{tpu_custom_call.1} parent=1 // pred_fallthru
      _
    // Predicated region
    $region6: #{tpu_custom_call.1} parent=1 // pred_check
      _
    $region7: #{tpu_custom_call.1} parent=1 // pred_check_branch
      %32 = sbr.rel (0) target = $region9
    $region8: #{tpu_custom_call.1} parent=1 // pred_region
      _
    $region9: #{tpu_custom_call.1} parent=1 // pred_fallthru
      _
    // Predicated region
    $region10: #{tpu_custom_call.1} parent=1 // pred_check
      _
    $region11: #{tpu_custom_call.1} parent=1 // pred_check_branch
      %34 = sbr.rel (0) target = $region13
    $region12: #{tpu_custom_call.1} parent=1 // pred_region
      _
    $region13: #{tpu_custom_call.1} parent=1 // pred_fallthru
      _
    // Predicated region
    $region14: #{tpu_custom_call.1} parent=1 // pred_check
      _
    $region15: #{tpu_custom_call.1} parent=1 // pred_check_branch
      %36 = sbr.rel (0) target = $region17
    $region16: #{tpu_custom_call.1} parent=1 // pred_region
      _
    $region17: #{tpu_custom_call.1} parent=1 // pred_fallthru
      _
    // Predicated region
    $region18: #{tpu_custom_call.1} parent=1 // pred_check
      _
    $region19: #{tpu_custom_call.1} parent=1 // pred_check_branch
      %38 = sbr.rel (0) target = $region21
    $region20: #{tpu_custom_call.1} parent=1 // pred_region
      _
    $region21: #{tpu_custom_call.1} parent=1 // pred_fallthru
      _
    // Predicated region
    $region22: #{tpu_custom_call.1} parent=1 // pred_check
      _
    $region23: #{tpu_custom_call.1} parent=1 // pred_check_branch
      %40 = sbr.rel (0) target = $region25
    $region24: #{tpu_custom_call.1} parent=1 // pred_region
      %s42 = ssub.s32 4096, 4096
      %43 = vsyncadd [#allocation9], %s42
      %s44 = sshll.u32 [#allocation8], 4
      %s45 = int_to_ptr.vmem [resolvable:$true] %s44
      %50 = dma.hbm_to_vmem [thread:$0]  %s9, 4096, %s45, [#allocation9], 1024, 1024, 64
    $region25: #{tpu_custom_call.1} parent=1 // pred_fallthru
      _
    // Predicated region
    $region26: #{tpu_custom_call.1} parent=1 // pred_check
      _
    $region27: #{tpu_custom_call.1} parent=1 // pred_check_branch
      %52 = sbr.rel (0) target = $region29
    $region28: #{tpu_custom_call.1} parent=1 // pred_region
      _
    $region29: #{tpu_custom_call.1} parent=1 // pred_fallthru
      _
    // Predicated region
    $region30: #{tpu_custom_call.1} parent=1 // pred_check
      _
    $region31: #{tpu_custom_call.1} parent=1 // pred_check_branch
      %54 = sbr.rel (0) target = $region33
    $region32: #{tpu_custom_call.1} parent=1 // pred_region
      %s56 = ssub.s32 16, 16
      %57 = vsyncadd [#allocation10], %s56
      %s59 = sshll.u32 %s11, 4
      %s60 = int_to_ptr.vmem [resolvable:$true] %s59
      %62 = dma.vmem_to_smem %s60, 16, [#allocation11], [#allocation10]
    $region33: #{tpu_custom_call.1} parent=1 // pred_fallthru
      _
    // Predicated region
    $region34: #{tpu_custom_call.1} parent=1 // pred_check
      _
    $region35: #{tpu_custom_call.1} parent=1 // pred_check_branch
      %64 = sbr.rel (0) target = $region37
    $region36: #{tpu_custom_call.1} parent=1 // pred_region
      %65 = dma.done [#allocation9], 4096
    $region37: #{tpu_custom_call.1} parent=1 // pred_fallthru
      _
    // Predicated region
    $region38: #{tpu_custom_call.1} parent=1 // pred_check
      _
    $region39: #{tpu_custom_call.1} parent=1 // pred_check_branch
      %67 = sbr.rel (0) target = $region41
    $region40: #{tpu_custom_call.1} parent=1 // pred_region
      %68 = dma.done [#allocation10], 16
    $region41: #{tpu_custom_call.1} parent=1 // pred_fallthru
      _
    %69 = sfence
    %s70 = smul.u32 0, 8
    loop: start=0, step=1, limit=8
    $region42: #{tpu_custom_call.1} parent=1 // loop_pre_header
      _
    $region43: #{tpu_custom_call.1} parent=1 // loop_header
      %s72 = sphi 0, %s76
      %p73 = scmp.ge.s32.totalorder %s72, 8
    $region44: #{tpu_custom_call.1} parent=1 // loop_header_branch
      %75 = sbr.rel (%p73) target = $region48
    $region45: #{tpu_custom_call.1} parent=1 // loop_body
      %s77 = sadd.s32 %s70, %s72
      %s78 = sld [smem:[#allocation6 + %s77]]
      %s79 = scalar_lea.vmem %s2, %s78
      %s80 = scalar_lea.vmem [#allocation2], %s72
      %p82 = scmp.lt.u32.totalorder 1, 8
      %p83 = pneg %p82
      // Predicated region
      $region49: #{tpu_custom_call.1} parent=45 // pred_check
        _
      $region50: #{tpu_custom_call.1} parent=45 // pred_check_branch
        %85 = sbr.rel (%p82) target = $region52
      $region51: #{tpu_custom_call.1} parent=45 // pred_region
        %s100 = sand.u32 1, 7
        %p101 = scmp.eq.s32.totalorder %s100, 0
        %p102 = pneg %p101
        // Predicated region
        $region64: #{tpu_custom_call.1} parent=51 // pred_check
          _
        $region65: #{tpu_custom_call.1} parent=51 // pred_check_branch
          %104 = sbr.rel (%p101) target = $region67
        $region66: #{tpu_custom_call.1} parent=51 // pred_region
          %s105 = sand.u32 1, 7
          %s106 = ssub.s32 1, %s105
          %s107 = scalar_lea.vmem %s79, %s106
          %s108 = ssub.s32 1, %s105
          %s109 = scalar_lea.vmem %s80, %s108 [#allocation2]
          %s110 = sshllo.u32 0, %s105
          loop: start=0, step=1, limit=1
          $region68: #{tpu_custom_call.1} parent=66 // loop_pre_header
            _
          $region69: #{tpu_custom_call.1} parent=66 // loop_header
            %s112 = sphi 0, %s116
            %p113 = scmp.ge.s32.totalorder %s112, 1
            %s117 = sphi %s107, %s107
            %s118 = sphi %s109, %s109
          $region70: #{tpu_custom_call.1} parent=66 // loop_header_branch
            %115 = sbr.rel (%p113) target = $region74
          $region71: #{tpu_custom_call.1} parent=66 // loop_body
            %v119 = vld [vmem:[%s117] sm:%s110]
            %120 = vst [vmem:[%s118] sm:%s110] %v119
          $region72: #{tpu_custom_call.1} parent=66 // loop_footer
            %s116 = sadd.s32 1, %s112
          $region73: #{tpu_custom_call.1} parent=66 // loop_footer_branch
            %111 = sbr.rel target = $region69
          $region74: #{tpu_custom_call.1} parent=66 // loop_exit
            _
        $region67: #{tpu_custom_call.1} parent=51 // pred_fallthru
          _
      $region52: #{tpu_custom_call.1} parent=45 // pred_fallthru
        _
      // Predicated region
      $region53: #{tpu_custom_call.1} parent=45 // pred_check
        %p86 = pneg %p82
      $region54: #{tpu_custom_call.1} parent=45 // pred_check_branch
        %88 = sbr.rel (%p86) target = $region56
      $region55: #{tpu_custom_call.1} parent=45 // pred_region
        %s89 = sshllo.u32 0, 1
        loop: start=0, step=1, limit=1
        $region57: #{tpu_custom_call.1} parent=55 // loop_pre_header
          _
        $region58: #{tpu_custom_call.1} parent=55 // loop_header
          %s91 = sphi 0, %s95
          %p92 = scmp.ge.s32.totalorder %s91, 1
          %s96 = sphi %s79, %s79
          %s97 = sphi %s80, %s80
        $region59: #{tpu_custom_call.1} parent=55 // loop_header_branch
          %94 = sbr.rel (%p92) target = $region63
        $region60: #{tpu_custom_call.1} parent=55 // loop_body
          %v98 = vld [vmem:[%s96] sm:%s89]
          %99 = vst [vmem:[%s97] sm:%s89] %v98
        $region61: #{tpu_custom_call.1} parent=55 // loop_footer
          %s95 = sadd.s32 1, %s91
        $region62: #{tpu_custom_call.1} parent=55 // loop_footer_branch
          %90 = sbr.rel target = $region58
        $region63: #{tpu_custom_call.1} parent=55 // loop_exit
          _
      $region56: #{tpu_custom_call.1} parent=45 // pred_fallthru
        _
      // Predicated region
      $region75: #{tpu_custom_call.1} parent=45 // pred_check
        _
      $region76: #{tpu_custom_call.1} parent=45 // pred_check_branch
        %123 = sbr.rel (0) target = $region78
      $region77: #{tpu_custom_call.1} parent=45 // pred_region
        %124 = vsyncadd [#allocation4], 16
      $region78: #{tpu_custom_call.1} parent=45 // pred_fallthru
        _
      %s125 = sld [smem:[#allocation7 + %s77]]
      %s126 = scalar_lea.vmem %s3, %s125
      %s127 = scalar_lea.vmem [#allocation3], %s72
      %s128 = scalar_lea.sflag [#allocation4], 1
      %p130 = scmp.lt.u32.totalorder 1, 8
      %p131 = pneg %p130
      // Predicated region
      $region79: #{tpu_custom_call.1} parent=45 // pred_check
        _
      $region80: #{tpu_custom_call.1} parent=45 // pred_check_branch
        %133 = sbr.rel (%p130) target = $region82
      $region81: #{tpu_custom_call.1} parent=45 // pred_region
        %s148 = sand.u32 1, 7
        %p149 = scmp.eq.s32.totalorder %s148, 0
        %p150 = pneg %p149
        // Predicated region
        $region94: #{tpu_custom_call.1} parent=81 // pred_check
          _
        $region95: #{tpu_custom_call.1} parent=81 // pred_check_branch
          %152 = sbr.rel (%p149) target = $region97
        $region96: #{tpu_custom_call.1} parent=81 // pred_region
          %s153 = sand.u32 1, 7
          %s154 = ssub.s32 1, %s153
          %s155 = scalar_lea.vmem %s126, %s154
          %s156 = ssub.s32 1, %s153
          %s157 = scalar_lea.vmem %s127, %s156 [#allocation3]
          %s158 = sshllo.u32 0, %s153
          loop: start=0, step=1, limit=1
          $region98: #{tpu_custom_call.1} parent=96 // loop_pre_header
            _
          $region99: #{tpu_custom_call.1} parent=96 // loop_header
            %s160 = sphi 0, %s164
            %p161 = scmp.ge.s32.totalorder %s160, 1
            %s165 = sphi %s155, %s155
            %s166 = sphi %s157, %s157
          $region100: #{tpu_custom_call.1} parent=96 // loop_header_branch
            %163 = sbr.rel (%p161) target = $region104
          $region101: #{tpu_custom_call.1} parent=96 // loop_body
            %v167 = vld [vmem:[%s165] sm:%s158]
            %168 = vst [vmem:[%s166] sm:%s158] %v167
          $region102: #{tpu_custom_call.1} parent=96 // loop_footer
            %s164 = sadd.s32 1, %s160
          $region103: #{tpu_custom_call.1} parent=96 // loop_footer_branch
            %159 = sbr.rel target = $region99
          $region104: #{tpu_custom_call.1} parent=96 // loop_exit
            _
        $region97: #{tpu_custom_call.1} parent=81 // pred_fallthru
          _
      $region82: #{tpu_custom_call.1} parent=45 // pred_fallthru
        _
      // Predicated region
      $region83: #{tpu_custom_call.1} parent=45 // pred_check
        %p134 = pneg %p130
      $region84: #{tpu_custom_call.1} parent=45 // pred_check_branch
        %136 = sbr.rel (%p134) target = $region86
      $region85: #{tpu_custom_call.1} parent=45 // pred_region
        %s137 = sshllo.u32 0, 1
        loop: start=0, step=1, limit=1
        $region87: #{tpu_custom_call.1} parent=85 // loop_pre_header
          _
        $region88: #{tpu_custom_call.1} parent=85 // loop_header
          %s139 = sphi 0, %s143
          %p140 = scmp.ge.s32.totalorder %s139, 1
          %s144 = sphi %s126, %s126
          %s145 = sphi %s127, %s127
        $region89: #{tpu_custom_call.1} parent=85 // loop_header_branch
          %142 = sbr.rel (%p140) target = $region93
        $region90: #{tpu_custom_call.1} parent=85 // loop_body
          %v146 = vld [vmem:[%s144] sm:%s137]
          %147 = vst [vmem:[%s145] sm:%s137] %v146
        $region91: #{tpu_custom_call.1} parent=85 // loop_footer
          %s143 = sadd.s32 1, %s139
        $region92: #{tpu_custom_call.1} parent=85 // loop_footer_branch
          %138 = sbr.rel target = $region88
        $region93: #{tpu_custom_call.1} parent=85 // loop_exit
          _
      $region86: #{tpu_custom_call.1} parent=45 // pred_fallthru
        _
      // Predicated region
      $region105: #{tpu_custom_call.1} parent=45 // pred_check
        _
      $region106: #{tpu_custom_call.1} parent=45 // pred_check_branch
        %171 = sbr.rel (0) target = $region108
      $region107: #{tpu_custom_call.1} parent=45 // pred_region
        %172 = vsyncadd %s128, 16
      $region108: #{tpu_custom_call.1} parent=45 // pred_fallthru
        _
    $region46: #{tpu_custom_call.1} parent=1 // loop_footer
      %s76 = sadd.s32 1, %s72
    $region47: #{tpu_custom_call.1} parent=1 // loop_footer_branch
      %71 = sbr.rel target = $region43
    $region48: #{tpu_custom_call.1} parent=1 // loop_exit
      _
    loop: start=0, step=1, limit=8
    $region109: #{tpu_custom_call.1} parent=1 // loop_pre_header
      _
    $region110: #{tpu_custom_call.1} parent=1 // loop_header
      %s174 = sphi 0, %s178
      %p175 = scmp.ge.s32.totalorder %s174, 8
    $region111: #{tpu_custom_call.1} parent=1 // loop_header_branch
      %177 = sbr.rel (%p175) target = $region115
    $region112: #{tpu_custom_call.1} parent=1 // loop_body
      %180 = dma.done [#allocation4], 16
      %s181 = scalar_lea.sflag [#allocation4], 1
      %183 = dma.done %s181, 16
    $region113: #{tpu_custom_call.1} parent=1 // loop_footer
      %s178 = sadd.s32 1, %s174
    $region114: #{tpu_custom_call.1} parent=1 // loop_footer_branch
      %173 = sbr.rel target = $region110
    $region115: #{tpu_custom_call.1} parent=1 // loop_exit
      _
    %s184 = sld [smem:[#allocation11]]
    %s185 = sld [smem:[#allocation11 + $0x1]]
    %s186 = sld [smem:[#allocation11 + $0x2]]
    %v187 = vld [vmem:[#allocation2] sm:$0xff]
    %v188 = vld [vmem:[%s4] sm:$0xff]
    %v189 = vld [vmem:[%s4 + $0x8] sm:$0xff]
    %v190 = vld [vmem:[%s4 + $0x10] sm:$0xff]
    %v191 = vld [vmem:[%s4 + $0x18] sm:$0xff]
    %v192 = vld [vmem:[%s4 + $0x20] sm:$0xff]
    %v193 = vld [vmem:[%s4 + $0x28] sm:$0xff]
    %v194 = vld [vmem:[%s4 + $0x30] sm:$0xff]
    %v195 = vld [vmem:[%s4 + $0x38] sm:$0xff]
    %v196 = vld [vmem:[%s5] sm:$0x1]
    %v198 = vlaneseq
    %v199 = vshrl.u32 %v198, 7
    %v200 = vsub.s32 0, %v199
    %v201 = vrot.slane %v196, %v200
    %vm203 = vcmask 523264
    %v205 = vsel %vm203, %v187, 0
    %207 = vmatprep.subr.mxu0 0.0
    %208 = vmatpush1.msra.mxu0 %v188
    %209 = vmatprep.subr.mxu0 0.0
    %210 = vmatpush1.msra.mxu0 %v189
    %211 = vmatprep.subr.mxu0 0.0
    %212 = vmatpush1.msra.mxu0 %v190
    %213 = vmatprep.subr.mxu0 0.0
    %214 = vmatpush1.msra.mxu0 %v191
    %215 = vmatprep.subr.mxu0 0.0
    %216 = vmatpush1.msra.mxu0 %v192
    %217 = vmatprep.subr.mxu0 0.0
    %218 = vmatpush1.msra.mxu0 %v193
    %219 = vmatprep.subr.mxu0 0.0
    %220 = vmatpush1.msra.mxu0 %v194
    %221 = vmatprep.subr.mxu0 0.0
    %222 = vmatpush1.msra.mxu0 %v195
    %223 = vmatprep.subr.mxu0 0.0
    %224 = vmatpush1.msra.mxu0 0.0
    %225 = vmatprep.subr.mxu0 0.0
    %226 = vmatpush1.msra.mxu0 0.0
    %227 = vmatprep.subr.mxu0 0.0
    %228 = vmatpush1.msra.mxu0 0.0
    %229 = vmatprep.subr.mxu0 0.0
    %230 = vmatpush1.msra.mxu0 0.0
    %231 = vmatprep.subr.mxu0 0.0
    %232 = vmatpush1.msra.mxu0 0.0
    %233 = vmatprep.subr.mxu0 0.0
    %234 = vmatpush1.msra.mxu0 0.0
    %235 = vmatprep.subr.mxu0 0.0
    %236 = vmatpush1.msra.mxu0 0.0
    %237 = vmatprep.subr.mxu0 0.0
    %238 = vmatpush1.msra.mxu0 0.0
    %239 = vmatprep.subr.mxu0 0.0
    %240 = vmatpush1.msra.mxu0 0.0
    %241 = vmatprep.subr.mxu0 0.0
    %242 = vmatpush1.msra.mxu0 0.0
    %243 = vmatprep.subr.mxu0 0.0
    %244 = vmatpush1.msra.mxu0 0.0
    %245 = vmatprep.subr.mxu0 0.0
    %246 = vmatpush1.msra.mxu0 0.0
    %247 = vmatprep.subr.mxu0 0.0
    %248 = vmatpush1.msra.mxu0 0.0
    %249 = vmatprep.subr.mxu0 0.0
    %250 = vmatpush1.msra.mxu0 0.0
    %251 = vmatprep.subr.mxu0 0.0
    %252 = vmatpush1.msra.mxu0 0.0
    %253 = vmatprep.subr.mxu0 0.0
    %254 = vmatpush1.msra.mxu0 0.0
    %255 = vmatprep.subr.mxu0 0.0
    %256 = vmatpush1.msra.mxu0 0.0
    %257 = vmatprep.subr.mxu0 0.0
    %258 = vmatpush1.msra.mxu0 0.0
    %259 = vmatprep.subr.mxu0 0.0
    %260 = vmatpush1.msra.mxu0 0.0
    %261 = vmatprep.subr.mxu0 0.0
    %262 = vmatpush1.msra.mxu0 0.0
    %263 = vmatprep.subr.mxu0 0.0
    %264 = vmatpush1.msra.mxu0 0.0
    %265 = vmatprep.subr.mxu0 0.0
    %266 = vmatpush1.msra.mxu0 0.0
    %267 = vmatprep.subr.mxu0 0.0
    %268 = vmatpush1.msra.mxu0 0.0
    %269 = vmatprep.subr.mxu0 0.0
    %270 = vmatpush1.msra.mxu0 0.0
    %271 = vmatprep.mubr.f32.mxu0 0.0
    %272 = vmatmul.mubr.f32.gmra.mrb[0].mxu0 %v205
    %v273 = vpop.f32.mrb[0].mxu0
    %v274 = vadd.f32 %v201, %v273
    %v275 = vpop.f32.mrb[0].mxu0
    %276 = vdwg.mxu0
    %v277 = vstv %s184
    %v278 = vmul.f32 %v274, %v277
    %v279 = vld [vmem:[#allocation3] sm:$0xff]
    %v280 = vld [vmem:[%s6] sm:$0xff]
    %v281 = vld [vmem:[%s6 + $0x8] sm:$0xff]
    %v282 = vld [vmem:[%s6 + $0x10] sm:$0xff]
    %v283 = vld [vmem:[%s6 + $0x18] sm:$0xff]
    %v284 = vld [vmem:[%s6 + $0x20] sm:$0xff]
    %v285 = vld [vmem:[%s6 + $0x28] sm:$0xff]
    %v286 = vld [vmem:[%s7] sm:$0x1]
    %v288 = vlaneseq
    %v289 = vshrl.u32 %v288, 7
    %v290 = vsub.s32 0, %v289
    %v291 = vrot.slane %v286, %v290
    %vm293 = vcmask 392192
    %v295 = vsel %vm293, %v279, 0
    %297 = vmatprep.subr.mxu0 0.0
    %298 = vmatpush1.msra.mxu0 %v280
    %299 = vmatprep.subr.mxu0 0.0
    %300 = vmatpush1.msra.mxu0 %v281
    %301 = vmatprep.subr.mxu0 0.0
    %302 = vmatpush1.msra.mxu0 %v282
    %303 = vmatprep.subr.mxu0 0.0
    %304 = vmatpush1.msra.mxu0 %v283
    %305 = vmatprep.subr.mxu0 0.0
    %306 = vmatpush1.msra.mxu0 %v284
    %307 = vmatprep.subr.mxu0 0.0
    %308 = vmatpush1.msra.mxu0 %v285
    %309 = vmatprep.subr.mxu0 0.0
    %310 = vmatpush1.msra.mxu0 0.0
    %311 = vmatprep.subr.mxu0 0.0
    %312 = vmatpush1.msra.mxu0 0.0
    %313 = vmatprep.subr.mxu0 0.0
    %314 = vmatpush1.msra.mxu0 0.0
    %315 = vmatprep.subr.mxu0 0.0
    %316 = vmatpush1.msra.mxu0 0.0
    %317 = vmatprep.subr.mxu0 0.0
    %318 = vmatpush1.msra.mxu0 0.0
    %319 = vmatprep.subr.mxu0 0.0
    %320 = vmatpush1.msra.mxu0 0.0
    %321 = vmatprep.subr.mxu0 0.0
    %322 = vmatpush1.msra.mxu0 0.0
    %323 = vmatprep.subr.mxu0 0.0
    %324 = vmatpush1.msra.mxu0 0.0
    %325 = vmatprep.subr.mxu0 0.0
    %326 = vmatpush1.msra.mxu0 0.0
    %327 = vmatprep.subr.mxu0 0.0
    %328 = vmatpush1.msra.mxu0 0.0
    %329 = vmatprep.subr.mxu0 0.0
    %330 = vmatpush1.msra.mxu0 0.0
    %331 = vmatprep.subr.mxu0 0.0
    %332 = vmatpush1.msra.mxu0 0.0
    %333 = vmatprep.subr.mxu0 0.0
    %334 = vmatpush1.msra.mxu0 0.0
    %335 = vmatprep.subr.mxu0 0.0
    %336 = vmatpush1.msra.mxu0 0.0
    %337 = vmatprep.subr.mxu0 0.0
    %338 = vmatpush1.msra.mxu0 0.0
    %339 = vmatprep.subr.mxu0 0.0
    %340 = vmatpush1.msra.mxu0 0.0
    %341 = vmatprep.subr.mxu0 0.0
    %342 = vmatpush1.msra.mxu0 0.0
    %343 = vmatprep.subr.mxu0 0.0
    %344 = vmatpush1.msra.mxu0 0.0
    %345 = vmatprep.subr.mxu0 0.0
    %346 = vmatpush1.msra.mxu0 0.0
    %347 = vmatprep.subr.mxu0 0.0
    %348 = vmatpush1.msra.mxu0 0.0
    %349 = vmatprep.subr.mxu0 0.0
    %350 = vmatpush1.msra.mxu0 0.0
    %351 = vmatprep.subr.mxu0 0.0
    %352 = vmatpush1.msra.mxu0 0.0
    %353 = vmatprep.subr.mxu0 0.0
    %354 = vmatpush1.msra.mxu0 0.0
    %355 = vmatprep.subr.mxu0 0.0
    %356 = vmatpush1.msra.mxu0 0.0
    %357 = vmatprep.subr.mxu0 0.0
    %358 = vmatpush1.msra.mxu0 0.0
    %359 = vmatprep.subr.mxu0 0.0
    %360 = vmatpush1.msra.mxu0 0.0
    %361 = vmatprep.mubr.f32.mxu0 0.0
    %362 = vmatmul.mubr.f32.gmra.mrb[0].mxu0 %v295
    %v363 = vpop.f32.mrb[0].mxu0
    %v364 = vadd.f32 %v291, %v363
    %v365 = vpop.f32.mrb[0].mxu0
    %366 = vdwg.mxu0
    %v367 = vld [vmem:[%s8] sm:$0xff]
    %v368 = vld [vmem:[%s8 + $0x8] sm:$0xff]
    %v369 = vld [vmem:[%s8 + $0x10] sm:$0xff]
    %v370 = vld [vmem:[%s8 + $0x18] sm:$0xff]
    %v371 = vld [vmem:[%s8 + $0x20] sm:$0xff]
    %v372 = vld [vmem:[%s8 + $0x28] sm:$0xff]
    %v373 = vld [vmem:[%s8 + $0x30] sm:$0xff]
    %v374 = vld [vmem:[%s8 + $0x38] sm:$0xff]
    %v375 = vld [vmem:[%s8 + $0x40] sm:$0xff]
    %v376 = vld [vmem:[%s8 + $0x48] sm:$0xff]
    %v377 = vld [vmem:[%s8 + $0x50] sm:$0xff]
    %v378 = vld [vmem:[%s8 + $0x58] sm:$0xff]
    %v379 = vld [vmem:[%s8 + $0x60] sm:$0xff]
    %v380 = vld [vmem:[%s8 + $0x68] sm:$0xff]
    %v381 = vld [vmem:[%s8 + $0x70] sm:$0xff]
    %v382 = vld [vmem:[%s8 + $0x78] sm:$0xff]
    %v383 = vld [vmem:[%s8 + $0x80] sm:$0xff]
    %v384 = vld [vmem:[%s8 + $0x88] sm:$0xff]
    %v385 = vld [vmem:[%s8 + $0x90] sm:$0xff]
    %v386 = vld [vmem:[%s8 + $0x98] sm:$0xff]
    %v387 = vld [vmem:[%s8 + $0xa0] sm:$0xff]
    %v388 = vld [vmem:[%s8 + $0xa8] sm:$0xff]
    %v389 = vld [vmem:[%s8 + $0xb0] sm:$0xff]
    %v390 = vld [vmem:[%s8 + $0xb8] sm:$0xff]
    %v391 = vld [vmem:[%s8 + $0xc0] sm:$0xff]
    %v392 = vld [vmem:[%s8 + $0xc8] sm:$0xff]
    %v393 = vld [vmem:[%s8 + $0xd0] sm:$0xff]
    %v394 = vld [vmem:[%s8 + $0xd8] sm:$0xff]
    %v395 = vld [vmem:[%s8 + $0xe0] sm:$0xff]
    %v396 = vld [vmem:[%s8 + $0xe8] sm:$0xff]
    %v397 = vld [vmem:[%s8 + $0xf0] sm:$0xff]
    %v398 = vld [vmem:[%s8 + $0xf8] sm:$0xff]
    %vm399 = vcmask 261120
    %v401 = vsel %vm399, %v278, 0
    %403 = vmatprep.subr.mxu0 %v368
    %404 = vmatpush1.msra.mxu0 %v367
    %405 = vmatprep.subr.mxu0 %v376
    %406 = vmatpush1.msra.mxu0 %v375
    %407 = vmatprep.subr.mxu0 %v384
    %408 = vmatpush1.msra.mxu0 %v383
    %409 = vmatprep.subr.mxu0 %v392
    %410 = vmatpush1.msra.mxu0 %v391
    %411 = vmatprep.subr.mxu0 0.0
    %412 = vmatpush1.msra.mxu0 0.0
    %413 = vmatprep.subr.mxu0 0.0
    %414 = vmatpush1.msra.mxu0 0.0
    %415 = vmatprep.subr.mxu0 0.0
    %416 = vmatpush1.msra.mxu0 0.0
    %417 = vmatprep.subr.mxu0 0.0
    %418 = vmatpush1.msra.mxu0 0.0
    %419 = vmatprep.subr.mxu0 0.0
    %420 = vmatpush1.msra.mxu0 0.0
    %421 = vmatprep.subr.mxu0 0.0
    %422 = vmatpush1.msra.mxu0 0.0
    %423 = vmatprep.subr.mxu0 0.0
    %424 = vmatpush1.msra.mxu0 0.0
    %425 = vmatprep.subr.mxu0 0.0
    %426 = vmatpush1.msra.mxu0 0.0
    %427 = vmatprep.subr.mxu0 0.0
    %428 = vmatpush1.msra.mxu0 0.0
    %429 = vmatprep.subr.mxu0 0.0
    %430 = vmatpush1.msra.mxu0 0.0
    %431 = vmatprep.subr.mxu0 0.0
    %432 = vmatpush1.msra.mxu0 0.0
    %433 = vmatprep.subr.mxu0 0.0
    %434 = vmatpush1.msra.mxu0 0.0
    %435 = vmatprep.subr.mxu0 0.0
    %436 = vmatpush1.msra.mxu0 0.0
    %437 = vmatprep.subr.mxu0 0.0
    %438 = vmatpush1.msra.mxu0 0.0
    %439 = vmatprep.subr.mxu0 0.0
    %440 = vmatpush1.msra.mxu0 0.0
    %441 = vmatprep.subr.mxu0 0.0
    %442 = vmatpush1.msra.mxu0 0.0
    %443 = vmatprep.subr.mxu0 0.0
    %444 = vmatpush1.msra.mxu0 0.0
    %445 = vmatprep.subr.mxu0 0.0
    %446 = vmatpush1.msra.mxu0 0.0
    %447 = vmatprep.subr.mxu0 0.0
    %448 = vmatpush1.msra.mxu0 0.0
    %449 = vmatprep.subr.mxu0 0.0
    %450 = vmatpush1.msra.mxu0 0.0
    %451 = vmatprep.subr.mxu0 0.0
    %452 = vmatpush1.msra.mxu0 0.0
    %453 = vmatprep.subr.mxu0 0.0
    %454 = vmatpush1.msra.mxu0 0.0
    %455 = vmatprep.subr.mxu0 0.0
    %456 = vmatpush1.msra.mxu0 0.0
    %457 = vmatprep.subr.mxu0 0.0
    %458 = vmatpush1.msra.mxu0 0.0
    %459 = vmatprep.subr.mxu0 0.0
    %460 = vmatpush1.msra.mxu0 0.0
    %461 = vmatprep.subr.mxu0 0.0
    %462 = vmatpush1.msra.mxu0 0.0
    %463 = vmatprep.subr.mxu0 0.0
    %464 = vmatpush1.msra.mxu0 0.0
    %465 = vmatprep.subr.mxu0 0.0
    %466 = vmatpush1.msra.mxu0 0.0
    %467 = vmatprep.mubr.f32.mxu0 0.0
    %468 = vmatmul.mubr.f32.gmra.mrb[0].mxu0 %v401
    %v469 = vpop.f32.mrb[0].mxu0
    %v470 = vadd.f32 0.0, %v469
    %v471 = vpop.f32.mrb[0].mxu0
    %v472 = vadd.f32 0.0, %v471
    %473 = vdwg.mxu0
    %474 = vmatprep.subr.mxu0 %v370
    %475 = vmatpush1.msra.mxu0 %v369
    %476 = vmatprep.subr.mxu0 %v378
    %477 = vmatpush1.msra.mxu0 %v377
    %478 = vmatprep.subr.mxu0 %v386
    %479 = vmatpush1.msra.mxu0 %v385
    %480 = vmatprep.subr.mxu0 %v394
    %481 = vmatpush1.msra.mxu0 %v393
    %482 = vmatprep.subr.mxu0 0.0
    %483 = vmatpush1.msra.mxu0 0.0
    %484 = vmatprep.subr.mxu0 0.0
    %485 = vmatpush1.msra.mxu0 0.0
    %486 = vmatprep.subr.mxu0 0.0
    %487 = vmatpush1.msra.mxu0 0.0
    %488 = vmatprep.subr.mxu0 0.0
    %489 = vmatpush1.msra.mxu0 0.0
    %490 = vmatprep.subr.mxu0 0.0
    %491 = vmatpush1.msra.mxu0 0.0
    %492 = vmatprep.subr.mxu0 0.0
    %493 = vmatpush1.msra.mxu0 0.0
    %494 = vmatprep.subr.mxu0 0.0
    %495 = vmatpush1.msra.mxu0 0.0
    %496 = vmatprep.subr.mxu0 0.0
    %497 = vmatpush1.msra.mxu0 0.0
    %498 = vmatprep.subr.mxu0 0.0
    %499 = vmatpush1.msra.mxu0 0.0
    %500 = vmatprep.subr.mxu0 0.0
    %501 = vmatpush1.msra.mxu0 0.0
    %502 = vmatprep.subr.mxu0 0.0
    %503 = vmatpush1.msra.mxu0 0.0
    %504 = vmatprep.subr.mxu0 0.0
    %505 = vmatpush1.msra.mxu0 0.0
    %506 = vmatprep.subr.mxu0 0.0
    %507 = vmatpush1.msra.mxu0 0.0
    %508 = vmatprep.subr.mxu0 0.0
    %509 = vmatpush1.msra.mxu0 0.0
    %510 = vmatprep.subr.mxu0 0.0
    %511 = vmatpush1.msra.mxu0 0.0
    %512 = vmatprep.subr.mxu0 0.0
    %513 = vmatpush1.msra.mxu0 0.0
    %514 = vmatprep.subr.mxu0 0.0
    %515 = vmatpush1.msra.mxu0 0.0
    %516 = vmatprep.subr.mxu0 0.0
    %517 = vmatpush1.msra.mxu0 0.0
    %518 = vmatprep.subr.mxu0 0.0
    %519 = vmatpush1.msra.mxu0 0.0
    %520 = vmatprep.subr.mxu0 0.0
    %521 = vmatpush1.msra.mxu0 0.0
    %522 = vmatprep.subr.mxu0 0.0
    %523 = vmatpush1.msra.mxu0 0.0
    %524 = vmatprep.subr.mxu0 0.0
    %525 = vmatpush1.msra.mxu0 0.0
    %526 = vmatprep.subr.mxu0 0.0
    %527 = vmatpush1.msra.mxu0 0.0
    %528 = vmatprep.subr.mxu0 0.0
    %529 = vmatpush1.msra.mxu0 0.0
    %530 = vmatprep.subr.mxu0 0.0
    %531 = vmatpush1.msra.mxu0 0.0
    %532 = vmatprep.subr.mxu0 0.0
    %533 = vmatpush1.msra.mxu0 0.0
    %534 = vmatprep.subr.mxu0 0.0
    %535 = vmatpush1.msra.mxu0 0.0
    %536 = vmatprep.subr.mxu0 0.0
    %537 = vmatpush1.msra.mxu0 0.0
    %538 = vmatprep.mubr.f32.mxu0 0.0
    %539 = vmatmul.mubr.f32.gmra.mrb[0].mxu0 %v401
    %v540 = vpop.f32.mrb[0].mxu0
    %v541 = vadd.f32 0.0, %v540
    %v542 = vpop.f32.mrb[0].mxu0
    %v543 = vadd.f32 0.0, %v542
    %544 = vdwg.mxu0
    %545 = vmatprep.subr.mxu0 %v372
    %546 = vmatpush1.msra.mxu0 %v371
    %547 = vmatprep.subr.mxu0 %v380
    %548 = vmatpush1.msra.mxu0 %v379
    %549 = vmatprep.subr.mxu0 %v388
    %550 = vmatpush1.msra.mxu0 %v387
    %551 = vmatprep.subr.mxu0 %v396
    %552 = vmatpush1.msra.mxu0 %v395
    %553 = vmatprep.subr.mxu0 0.0
    %554 = vmatpush1.msra.mxu0 0.0
    %555 = vmatprep.subr.mxu0 0.0
    %556 = vmatpush1.msra.mxu0 0.0
    %557 = vmatprep.subr.mxu0 0.0
    %558 = vmatpush1.msra.mxu0 0.0
    %559 = vmatprep.subr.mxu0 0.0
    %560 = vmatpush1.msra.mxu0 0.0
    %561 = vmatprep.subr.mxu0 0.0
    %562 = vmatpush1.msra.mxu0 0.0
    %563 = vmatprep.subr.mxu0 0.0
    %564 = vmatpush1.msra.mxu0 0.0
    %565 = vmatprep.subr.mxu0 0.0
    %566 = vmatpush1.msra.mxu0 0.0
    %567 = vmatprep.subr.mxu0 0.0
    %568 = vmatpush1.msra.mxu0 0.0
    %569 = vmatprep.subr.mxu0 0.0
    %570 = vmatpush1.msra.mxu0 0.0
    %571 = vmatprep.subr.mxu0 0.0
    %572 = vmatpush1.msra.mxu0 0.0
    %573 = vmatprep.subr.mxu0 0.0
    %574 = vmatpush1.msra.mxu0 0.0
    %575 = vmatprep.subr.mxu0 0.0
    %576 = vmatpush1.msra.mxu0 0.0
    %577 = vmatprep.subr.mxu0 0.0
    %578 = vmatpush1.msra.mxu0 0.0
    %579 = vmatprep.subr.mxu0 0.0
    %580 = vmatpush1.msra.mxu0 0.0
    %581 = vmatprep.subr.mxu0 0.0
    %582 = vmatpush1.msra.mxu0 0.0
    %583 = vmatprep.subr.mxu0 0.0
    %584 = vmatpush1.msra.mxu0 0.0
    %585 = vmatprep.subr.mxu0 0.0
    %586 = vmatpush1.msra.mxu0 0.0
    %587 = vmatprep.subr.mxu0 0.0
    %588 = vmatpush1.msra.mxu0 0.0
    %589 = vmatprep.subr.mxu0 0.0
    %590 = vmatpush1.msra.mxu0 0.0
    %591 = vmatprep.subr.mxu0 0.0
    %592 = vmatpush1.msra.mxu0 0.0
    %593 = vmatprep.subr.mxu0 0.0
    %594 = vmatpush1.msra.mxu0 0.0
    %595 = vmatprep.subr.mxu0 0.0
    %596 = vmatpush1.msra.mxu0 0.0
    %597 = vmatprep.subr.mxu0 0.0
    %598 = vmatpush1.msra.mxu0 0.0
    %599 = vmatprep.subr.mxu0 0.0
    %600 = vmatpush1.msra.mxu0 0.0
    %601 = vmatprep.subr.mxu0 0.0
    %602 = vmatpush1.msra.mxu0 0.0
    %603 = vmatprep.subr.mxu0 0.0
    %604 = vmatpush1.msra.mxu0 0.0
    %605 = vmatprep.subr.mxu0 0.0
    %606 = vmatpush1.msra.mxu0 0.0
    %607 = vmatprep.subr.mxu0 0.0
    %608 = vmatpush1.msra.mxu0 0.0
    %609 = vmatprep.mubr.f32.mxu0 0.0
    %610 = vmatmul.mubr.f32.gmra.mrb[0].mxu0 %v401
    %v611 = vpop.f32.mrb[0].mxu0
    %v612 = vadd.f32 0.0, %v611
    %v613 = vpop.f32.mrb[0].mxu0
    %v614 = vadd.f32 0.0, %v613
    %615 = vdwg.mxu0
    %616 = vmatprep.subr.mxu0 %v374
    %617 = vmatpush1.msra.mxu0 %v373
    %618 = vmatprep.subr.mxu0 %v382
    %619 = vmatpush1.msra.mxu0 %v381
    %620 = vmatprep.subr.mxu0 %v390
    %621 = vmatpush1.msra.mxu0 %v389
    %622 = vmatprep.subr.mxu0 %v398
    %623 = vmatpush1.msra.mxu0 %v397
    %624 = vmatprep.subr.mxu0 0.0
    %625 = vmatpush1.msra.mxu0 0.0
    %626 = vmatprep.subr.mxu0 0.0
    %627 = vmatpush1.msra.mxu0 0.0
    %628 = vmatprep.subr.mxu0 0.0
    %629 = vmatpush1.msra.mxu0 0.0
    %630 = vmatprep.subr.mxu0 0.0
    %631 = vmatpush1.msra.mxu0 0.0
    %632 = vmatprep.subr.mxu0 0.0
    %633 = vmatpush1.msra.mxu0 0.0
    %634 = vmatprep.subr.mxu0 0.0
    %635 = vmatpush1.msra.mxu0 0.0
    %636 = vmatprep.subr.mxu0 0.0
    %637 = vmatpush1.msra.mxu0 0.0
    %638 = vmatprep.subr.mxu0 0.0
    %639 = vmatpush1.msra.mxu0 0.0
    %640 = vmatprep.subr.mxu0 0.0
    %641 = vmatpush1.msra.mxu0 0.0
    %642 = vmatprep.subr.mxu0 0.0
    %643 = vmatpush1.msra.mxu0 0.0
    %644 = vmatprep.subr.mxu0 0.0
    %645 = vmatpush1.msra.mxu0 0.0
    %646 = vmatprep.subr.mxu0 0.0
    %647 = vmatpush1.msra.mxu0 0.0
    %648 = vmatprep.subr.mxu0 0.0
    %649 = vmatpush1.msra.mxu0 0.0
    %650 = vmatprep.subr.mxu0 0.0
    %651 = vmatpush1.msra.mxu0 0.0
    %652 = vmatprep.subr.mxu0 0.0
    %653 = vmatpush1.msra.mxu0 0.0
    %654 = vmatprep.subr.mxu0 0.0
    %655 = vmatpush1.msra.mxu0 0.0
    %656 = vmatprep.subr.mxu0 0.0
    %657 = vmatpush1.msra.mxu0 0.0
    %658 = vmatprep.subr.mxu0 0.0
    %659 = vmatpush1.msra.mxu0 0.0
    %660 = vmatprep.subr.mxu0 0.0
    %661 = vmatpush1.msra.mxu0 0.0
    %662 = vmatprep.subr.mxu0 0.0
    %663 = vmatpush1.msra.mxu0 0.0
    %664 = vmatprep.subr.mxu0 0.0
    %665 = vmatpush1.msra.mxu0 0.0
    %666 = vmatprep.subr.mxu0 0.0
    %667 = vmatpush1.msra.mxu0 0.0
    %668 = vmatprep.subr.mxu0 0.0
    %669 = vmatpush1.msra.mxu0 0.0
    %670 = vmatprep.subr.mxu0 0.0
    %671 = vmatpush1.msra.mxu0 0.0
    %672 = vmatprep.subr.mxu0 0.0
    %673 = vmatpush1.msra.mxu0 0.0
    %674 = vmatprep.subr.mxu0 0.0
    %675 = vmatpush1.msra.mxu0 0.0
    %676 = vmatprep.subr.mxu0 0.0
    %677 = vmatpush1.msra.mxu0 0.0
    %678 = vmatprep.subr.mxu0 0.0
    %679 = vmatpush1.msra.mxu0 0.0
    %680 = vmatprep.mubr.f32.mxu0 0.0
    %681 = vmatmul.mubr.f32.gmra.mrb[0].mxu0 %v401
    %v682 = vpop.f32.mrb[0].mxu0
    %v683 = vadd.f32 0.0, %v682
    %v684 = vpop.f32.mrb[0].mxu0
    %v685 = vadd.f32 0.0, %v684
    %686 = vdwg.mxu0
    %v687 = vld [vmem:[#allocation8] sm:$0xff]
    %v688 = vld [vmem:[#allocation8 + $0x8] sm:$0xff]
    %v689 = vld [vmem:[#allocation8 + $0x10] sm:$0xff]
    %v690 = vld [vmem:[#allocation8 + $0x18] sm:$0xff]
    %v691 = vld [vmem:[#allocation8 + $0x20] sm:$0xff]
    %v692 = vld [vmem:[#allocation8 + $0x28] sm:$0xff]
    %v693 = vld [vmem:[#allocation8 + $0x30] sm:$0xff]
    %v694 = vld [vmem:[#allocation8 + $0x38] sm:$0xff]
    %v695 = vld [vmem:[#allocation8 + $0x40] sm:$0xff]
    %v696 = vld [vmem:[#allocation8 + $0x48] sm:$0xff]
    %v697 = vld [vmem:[#allocation8 + $0x50] sm:$0xff]
    %v698 = vld [vmem:[#allocation8 + $0x58] sm:$0xff]
    %v699 = vld [vmem:[#allocation8 + $0x60] sm:$0xff]
    %v700 = vld [vmem:[#allocation8 + $0x68] sm:$0xff]
    %v701 = vld [vmem:[#allocation8 + $0x70] sm:$0xff]
    %v702 = vld [vmem:[#allocation8 + $0x78] sm:$0xff]
    %v703 = vld [vmem:[#allocation8 + $0x80] sm:$0xff]
    %v704 = vld [vmem:[#allocation8 + $0x88] sm:$0xff]
    %v705 = vld [vmem:[#allocation8 + $0x90] sm:$0xff]
    %v706 = vld [vmem:[#allocation8 + $0x98] sm:$0xff]
    %v707 = vld [vmem:[#allocation8 + $0xa0] sm:$0xff]
    %v708 = vld [vmem:[#allocation8 + $0xa8] sm:$0xff]
    %v709 = vld [vmem:[#allocation8 + $0xb0] sm:$0xff]
    %v710 = vld [vmem:[#allocation8 + $0xb8] sm:$0xff]
    %v711 = vld [vmem:[#allocation8 + $0xc0] sm:$0xff]
    %v712 = vld [vmem:[#allocation8 + $0xc8] sm:$0xff]
    %v713 = vld [vmem:[#allocation8 + $0xd0] sm:$0xff]
    %v714 = vld [vmem:[#allocation8 + $0xd8] sm:$0xff]
    %v715 = vld [vmem:[#allocation8 + $0xe0] sm:$0xff]
    %v716 = vld [vmem:[#allocation8 + $0xe8] sm:$0xff]
    %v717 = vld [vmem:[#allocation8 + $0xf0] sm:$0xff]
    %v718 = vld [vmem:[#allocation8 + $0xf8] sm:$0xff]
    %v720 = vsel %vm399, %v364, 0
    %722 = vmatprep.subr.mxu0 %v688
    %723 = vmatpush1.msra.mxu0 %v687
    %724 = vmatprep.subr.mxu0 %v696
    %725 = vmatpush1.msra.mxu0 %v695
    %726 = vmatprep.subr.mxu0 %v704
    %727 = vmatpush1.msra.mxu0 %v703
    %728 = vmatprep.subr.mxu0 %v712
    %729 = vmatpush1.msra.mxu0 %v711
    %730 = vmatprep.subr.mxu0 0.0
    %731 = vmatpush1.msra.mxu0 0.0
    %732 = vmatprep.subr.mxu0 0.0
    %733 = vmatpush1.msra.mxu0 0.0
    %734 = vmatprep.subr.mxu0 0.0
    %735 = vmatpush1.msra.mxu0 0.0
    %736 = vmatprep.subr.mxu0 0.0
    %737 = vmatpush1.msra.mxu0 0.0
    %738 = vmatprep.subr.mxu0 0.0
    %739 = vmatpush1.msra.mxu0 0.0
    %740 = vmatprep.subr.mxu0 0.0
    %741 = vmatpush1.msra.mxu0 0.0
    %742 = vmatprep.subr.mxu0 0.0
    %743 = vmatpush1.msra.mxu0 0.0
    %744 = vmatprep.subr.mxu0 0.0
    %745 = vmatpush1.msra.mxu0 0.0
    %746 = vmatprep.subr.mxu0 0.0
    %747 = vmatpush1.msra.mxu0 0.0
    %748 = vmatprep.subr.mxu0 0.0
    %749 = vmatpush1.msra.mxu0 0.0
    %750 = vmatprep.subr.mxu0 0.0
    %751 = vmatpush1.msra.mxu0 0.0
    %752 = vmatprep.subr.mxu0 0.0
    %753 = vmatpush1.msra.mxu0 0.0
    %754 = vmatprep.subr.mxu0 0.0
    %755 = vmatpush1.msra.mxu0 0.0
    %756 = vmatprep.subr.mxu0 0.0
    %757 = vmatpush1.msra.mxu0 0.0
    %758 = vmatprep.subr.mxu0 0.0
    %759 = vmatpush1.msra.mxu0 0.0
    %760 = vmatprep.subr.mxu0 0.0
    %761 = vmatpush1.msra.mxu0 0.0
    %762 = vmatprep.subr.mxu0 0.0
    %763 = vmatpush1.msra.mxu0 0.0
    %764 = vmatprep.subr.mxu0 0.0
    %765 = vmatpush1.msra.mxu0 0.0
    %766 = vmatprep.subr.mxu0 0.0
    %767 = vmatpush1.msra.mxu0 0.0
    %768 = vmatprep.subr.mxu0 0.0
    %769 = vmatpush1.msra.mxu0 0.0
    %770 = vmatprep.subr.mxu0 0.0
    %771 = vmatpush1.msra.mxu0 0.0
    %772 = vmatprep.subr.mxu0 0.0
    %773 = vmatpush1.msra.mxu0 0.0
    %774 = vmatprep.subr.mxu0 0.0
    %775 = vmatpush1.msra.mxu0 0.0
    %776 = vmatprep.subr.mxu0 0.0
    %777 = vmatpush1.msra.mxu0 0.0
    %778 = vmatprep.subr.mxu0 0.0
    %779 = vmatpush1.msra.mxu0 0.0
    %780 = vmatprep.subr.mxu0 0.0
    %781 = vmatpush1.msra.mxu0 0.0
    %782 = vmatprep.subr.mxu0 0.0
    %783 = vmatpush1.msra.mxu0 0.0
    %784 = vmatprep.subr.mxu0 0.0
    %785 = vmatpush1.msra.mxu0 0.0
    %786 = vmatprep.mubr.f32.mxu0 0.0
    %787 = vmatmul.mubr.f32.gmra.mrb[0].mxu0 %v720
    %v788 = vpop.f32.mrb[0].mxu0
    %v789 = vadd.f32 0.0, %v788
    %v790 = vpop.f32.mrb[0].mxu0
    %v791 = vadd.f32 0.0, %v790
    %792 = vdwg.mxu0
    %793 = vmatprep.subr.mxu0 %v690
    %794 = vmatpush1.msra.mxu0 %v689
    %795 = vmatprep.subr.mxu0 %v698
    %796 = vmatpush1.msra.mxu0 %v697
    %797 = vmatprep.subr.mxu0 %v706
    %798 = vmatpush1.msra.mxu0 %v705
    %799 = vmatprep.subr.mxu0 %v714
    %800 = vmatpush1.msra.mxu0 %v713
    %801 = vmatprep.subr.mxu0 0.0
    %802 = vmatpush1.msra.mxu0 0.0
    %803 = vmatprep.subr.mxu0 0.0
    %804 = vmatpush1.msra.mxu0 0.0
    %805 = vmatprep.subr.mxu0 0.0
    %806 = vmatpush1.msra.mxu0 0.0
    %807 = vmatprep.subr.mxu0 0.0
    %808 = vmatpush1.msra.mxu0 0.0
    %809 = vmatprep.subr.mxu0 0.0
    %810 = vmatpush1.msra.mxu0 0.0
    %811 = vmatprep.subr.mxu0 0.0
    %812 = vmatpush1.msra.mxu0 0.0
    %813 = vmatprep.subr.mxu0 0.0
    %814 = vmatpush1.msra.mxu0 0.0
    %815 = vmatprep.subr.mxu0 0.0
    %816 = vmatpush1.msra.mxu0 0.0
    %817 = vmatprep.subr.mxu0 0.0
    %818 = vmatpush1.msra.mxu0 0.0
    %819 = vmatprep.subr.mxu0 0.0
    %820 = vmatpush1.msra.mxu0 0.0
    %821 = vmatprep.subr.mxu0 0.0
    %822 = vmatpush1.msra.mxu0 0.0
    %823 = vmatprep.subr.mxu0 0.0
    %824 = vmatpush1.msra.mxu0 0.0
    %825 = vmatprep.subr.mxu0 0.0
    %826 = vmatpush1.msra.mxu0 0.0
    %827 = vmatprep.subr.mxu0 0.0
    %828 = vmatpush1.msra.mxu0 0.0
    %829 = vmatprep.subr.mxu0 0.0
    %830 = vmatpush1.msra.mxu0 0.0
    %831 = vmatprep.subr.mxu0 0.0
    %832 = vmatpush1.msra.mxu0 0.0
    %833 = vmatprep.subr.mxu0 0.0
    %834 = vmatpush1.msra.mxu0 0.0
    %835 = vmatprep.subr.mxu0 0.0
    %836 = vmatpush1.msra.mxu0 0.0
    %837 = vmatprep.subr.mxu0 0.0
    %838 = vmatpush1.msra.mxu0 0.0
    %839 = vmatprep.subr.mxu0 0.0
    %840 = vmatpush1.msra.mxu0 0.0
    %841 = vmatprep.subr.mxu0 0.0
    %842 = vmatpush1.msra.mxu0 0.0
    %843 = vmatprep.subr.mxu0 0.0
    %844 = vmatpush1.msra.mxu0 0.0
    %845 = vmatprep.subr.mxu0 0.0
    %846 = vmatpush1.msra.mxu0 0.0
    %847 = vmatprep.subr.mxu0 0.0
    %848 = vmatpush1.msra.mxu0 0.0
    %849 = vmatprep.subr.mxu0 0.0
    %850 = vmatpush1.msra.mxu0 0.0
    %851 = vmatprep.subr.mxu0 0.0
    %852 = vmatpush1.msra.mxu0 0.0
    %853 = vmatprep.subr.mxu0 0.0
    %854 = vmatpush1.msra.mxu0 0.0
    %855 = vmatprep.subr.mxu0 0.0
    %856 = vmatpush1.msra.mxu0 0.0
    %857 = vmatprep.mubr.f32.mxu0 0.0
    %858 = vmatmul.mubr.f32.gmra.mrb[0].mxu0 %v720
    %v859 = vpop.f32.mrb[0].mxu0
    %v860 = vadd.f32 0.0, %v859
    %v861 = vpop.f32.mrb[0].mxu0
    %v862 = vadd.f32 0.0, %v861
    %863 = vdwg.mxu0
    %864 = vmatprep.subr.mxu0 %v692
    %865 = vmatpush1.msra.mxu0 %v691
    %866 = vmatprep.subr.mxu0 %v700
    %867 = vmatpush1.msra.mxu0 %v699
    %868 = vmatprep.subr.mxu0 %v708
    %869 = vmatpush1.msra.mxu0 %v707
    %870 = vmatprep.subr.mxu0 %v716
    %871 = vmatpush1.msra.mxu0 %v715
    %872 = vmatprep.subr.mxu0 0.0
    %873 = vmatpush1.msra.mxu0 0.0
    %874 = vmatprep.subr.mxu0 0.0
    %875 = vmatpush1.msra.mxu0 0.0
    %876 = vmatprep.subr.mxu0 0.0
    %877 = vmatpush1.msra.mxu0 0.0
    %878 = vmatprep.subr.mxu0 0.0
    %879 = vmatpush1.msra.mxu0 0.0
    %880 = vmatprep.subr.mxu0 0.0
    %881 = vmatpush1.msra.mxu0 0.0
    %882 = vmatprep.subr.mxu0 0.0
    %883 = vmatpush1.msra.mxu0 0.0
    %884 = vmatprep.subr.mxu0 0.0
    %885 = vmatpush1.msra.mxu0 0.0
    %886 = vmatprep.subr.mxu0 0.0
    %887 = vmatpush1.msra.mxu0 0.0
    %888 = vmatprep.subr.mxu0 0.0
    %889 = vmatpush1.msra.mxu0 0.0
    %890 = vmatprep.subr.mxu0 0.0
    %891 = vmatpush1.msra.mxu0 0.0
    %892 = vmatprep.subr.mxu0 0.0
    %893 = vmatpush1.msra.mxu0 0.0
    %894 = vmatprep.subr.mxu0 0.0
    %895 = vmatpush1.msra.mxu0 0.0
    %896 = vmatprep.subr.mxu0 0.0
    %897 = vmatpush1.msra.mxu0 0.0
    %898 = vmatprep.subr.mxu0 0.0
    %899 = vmatpush1.msra.mxu0 0.0
    %900 = vmatprep.subr.mxu0 0.0
    %901 = vmatpush1.msra.mxu0 0.0
    %902 = vmatprep.subr.mxu0 0.0
    %903 = vmatpush1.msra.mxu0 0.0
    %904 = vmatprep.subr.mxu0 0.0
    %905 = vmatpush1.msra.mxu0 0.0
    %906 = vmatprep.subr.mxu0 0.0
    %907 = vmatpush1.msra.mxu0 0.0
    %908 = vmatprep.subr.mxu0 0.0
    %909 = vmatpush1.msra.mxu0 0.0
    %910 = vmatprep.subr.mxu0 0.0
    %911 = vmatpush1.msra.mxu0 0.0
    %912 = vmatprep.subr.mxu0 0.0
    %913 = vmatpush1.msra.mxu0 0.0
    %914 = vmatprep.subr.mxu0 0.0
    %915 = vmatpush1.msra.mxu0 0.0
    %916 = vmatprep.subr.mxu0 0.0
    %917 = vmatpush1.msra.mxu0 0.0
    %918 = vmatprep.subr.mxu0 0.0
    %919 = vmatpush1.msra.mxu0 0.0
    %920 = vmatprep.subr.mxu0 0.0
    %921 = vmatpush1.msra.mxu0 0.0
    %922 = vmatprep.subr.mxu0 0.0
    %923 = vmatpush1.msra.mxu0 0.0
    %924 = vmatprep.subr.mxu0 0.0
    %925 = vmatpush1.msra.mxu0 0.0
    %926 = vmatprep.subr.mxu0 0.0
    %927 = vmatpush1.msra.mxu0 0.0
    %928 = vmatprep.mubr.f32.mxu0 0.0
    %929 = vmatmul.mubr.f32.gmra.mrb[0].mxu0 %v720
    %v930 = vpop.f32.mrb[0].mxu0
    %v931 = vadd.f32 0.0, %v930
    %v932 = vpop.f32.mrb[0].mxu0
    %v933 = vadd.f32 0.0, %v932
    %934 = vdwg.mxu0
    %935 = vmatprep.subr.mxu0 %v694
    %936 = vmatpush1.msra.mxu0 %v693
    %937 = vmatprep.subr.mxu0 %v702
    %938 = vmatpush1.msra.mxu0 %v701
    %939 = vmatprep.subr.mxu0 %v710
    %940 = vmatpush1.msra.mxu0 %v709
    %941 = vmatprep.subr.mxu0 %v718
    %942 = vmatpush1.msra.mxu0 %v717
    %943 = vmatprep.subr.mxu0 0.0
    %944 = vmatpush1.msra.mxu0 0.0
    %945 = vmatprep.subr.mxu0 0.0
    %946 = vmatpush1.msra.mxu0 0.0
    %947 = vmatprep.subr.mxu0 0.0
    %948 = vmatpush1.msra.mxu0 0.0
    %949 = vmatprep.subr.mxu0 0.0
    %950 = vmatpush1.msra.mxu0 0.0
    %951 = vmatprep.subr.mxu0 0.0
    %952 = vmatpush1.msra.mxu0 0.0
    %953 = vmatprep.subr.mxu0 0.0
    %954 = vmatpush1.msra.mxu0 0.0
    %955 = vmatprep.subr.mxu0 0.0
    %956 = vmatpush1.msra.mxu0 0.0
    %957 = vmatprep.subr.mxu0 0.0
    %958 = vmatpush1.msra.mxu0 0.0
    %959 = vmatprep.subr.mxu0 0.0
    %960 = vmatpush1.msra.mxu0 0.0
    %961 = vmatprep.subr.mxu0 0.0
    %962 = vmatpush1.msra.mxu0 0.0
    %963 = vmatprep.subr.mxu0 0.0
    %964 = vmatpush1.msra.mxu0 0.0
    %965 = vmatprep.subr.mxu0 0.0
    %966 = vmatpush1.msra.mxu0 0.0
    %967 = vmatprep.subr.mxu0 0.0
    %968 = vmatpush1.msra.mxu0 0.0
    %969 = vmatprep.subr.mxu0 0.0
    %970 = vmatpush1.msra.mxu0 0.0
    %971 = vmatprep.subr.mxu0 0.0
    %972 = vmatpush1.msra.mxu0 0.0
    %973 = vmatprep.subr.mxu0 0.0
    %974 = vmatpush1.msra.mxu0 0.0
    %975 = vmatprep.subr.mxu0 0.0
    %976 = vmatpush1.msra.mxu0 0.0
    %977 = vmatprep.subr.mxu0 0.0
    %978 = vmatpush1.msra.mxu0 0.0
    %979 = vmatprep.subr.mxu0 0.0
    %980 = vmatpush1.msra.mxu0 0.0
    %981 = vmatprep.subr.mxu0 0.0
    %982 = vmatpush1.msra.mxu0 0.0
    %983 = vmatprep.subr.mxu0 0.0
    %984 = vmatpush1.msra.mxu0 0.0
    %985 = vmatprep.subr.mxu0 0.0
    %986 = vmatpush1.msra.mxu0 0.0
    %987 = vmatprep.subr.mxu0 0.0
    %988 = vmatpush1.msra.mxu0 0.0
    %989 = vmatprep.subr.mxu0 0.0
    %990 = vmatpush1.msra.mxu0 0.0
    %991 = vmatprep.subr.mxu0 0.0
    %992 = vmatpush1.msra.mxu0 0.0
    %993 = vmatprep.subr.mxu0 0.0
    %994 = vmatpush1.msra.mxu0 0.0
    %995 = vmatprep.subr.mxu0 0.0
    %996 = vmatpush1.msra.mxu0 0.0
    %997 = vmatprep.subr.mxu0 0.0
    %998 = vmatpush1.msra.mxu0 0.0
    %999 = vmatprep.mubr.f32.mxu0 0.0
    %1000 = vmatmul.mubr.f32.gmra.mrb[0].mxu0 %v720
    %v1001 = vpop.f32.mrb[0].mxu0
    %v1002 = vadd.f32 0.0, %v1001
    %v1003 = vpop.f32.mrb[0].mxu0
    %v1004 = vadd.f32 0.0, %v1003
    %1005 = vdwg.mxu0
    %v1006 = vmul.f32 %v470, %v789
    %v1007 = vmul.f32 %v472, %v791
    %v1008 = vmul.f32 %v541, %v860
    %v1009 = vmul.f32 %v543, %v862
    %v1010 = vmul.f32 %v612, %v931
    %v1011 = vmul.f32 %v614, %v933
    %v1012 = vmul.f32 %v683, %v1002
    %v1013 = vmul.f32 %v685, %v1004
    %v1014 = vstv %s185
    %v1015 = vadd.f32 %v1006, %v1014
    %v1016 = vadd.f32 %v1007, %v1014
    %v1017 = vadd.f32 %v1008, %v1014
    %v1018 = vadd.f32 %v1009, %v1014
    %v1019 = vadd.f32 %v1010, %v1014
    %v1020 = vadd.f32 %v1011, %v1014
    %v1021 = vadd.f32 %v1012, %v1014
    %v1022 = vadd.f32 %v1013, %v1014
    %v1023 = vmax.f32 %v1015, 0.0
    %v1024 = vmax.f32 %v1016, 0.0
    %v1025 = vmax.f32 %v1017, 0.0
    %v1026 = vmax.f32 %v1018, 0.0
    %v1027 = vmax.f32 %v1019, 0.0
    %v1028 = vmax.f32 %v1020, 0.0
    %v1029 = vmax.f32 %v1021, 0.0
    %v1030 = vmax.f32 %v1022, 0.0
    %v1031 = vld [vmem:[%s10] sm:$0xff]
    %v1033 = vlaneseq
    %v1034 = vshrl.u32 %v1033, 7
    %v1035 = vsub.s32 0, %v1034
    %v1036 = vrot.slane %v1031, %v1035
    %v1037 = vlaneseq
    %v1038 = vshrl.u32 %v1037, 7
    %v1039 = vsub.s32 1, %v1038
    %v1040 = vrot.slane %v1031, %v1039
    %v1041 = vlaneseq
    %v1042 = vshrl.u32 %v1041, 7
    %v1043 = vsub.s32 2, %v1042
    %v1044 = vrot.slane %v1031, %v1043
    %v1045 = vlaneseq
    %v1046 = vshrl.u32 %v1045, 7
    %v1047 = vsub.s32 3, %v1046
    %v1048 = vrot.slane %v1031, %v1047
    %v1049 = vlaneseq
    %v1050 = vshrl.u32 %v1049, 7
    %v1051 = vsub.s32 4, %v1050
    %v1052 = vrot.slane %v1031, %v1051
    %v1053 = vlaneseq
    %v1054 = vshrl.u32 %v1053, 7
    %v1055 = vsub.s32 5, %v1054
    %v1056 = vrot.slane %v1031, %v1055
    %v1057 = vlaneseq
    %v1058 = vshrl.u32 %v1057, 7
    %v1059 = vsub.s32 6, %v1058
    %v1060 = vrot.slane %v1031, %v1059
    %v1061 = vlaneseq
    %v1062 = vshrl.u32 %v1061, 7
    %v1063 = vsub.s32 7, %v1062
    %v1064 = vrot.slane %v1031, %v1063
    %v1073 = vmul.f32 %v1023, %v1036
    %v1074 = vmul.f32 %v1024, %v1040
    %v1075 = vmul.f32 %v1025, %v1044
    %v1076 = vmul.f32 %v1026, %v1048
    %v1077 = vmul.f32 %v1027, %v1052
    %v1078 = vmul.f32 %v1028, %v1056
    %v1079 = vmul.f32 %v1029, %v1060
    %v1080 = vmul.f32 %v1030, %v1064
    %v1081 = vadd.f32 %v1073, %v1074
    %v1082 = vadd.f32 %v1081, %v1075
    %v1083 = vadd.f32 %v1082, %v1076
    %v1084 = vadd.f32 %v1083, %v1077
    %v1085 = vadd.f32 %v1084, %v1078
    %v1086 = vadd.f32 %v1085, %v1079
    %v1087 = vadd.f32 %v1086, %v1080
    %1088 = vadd.xlane.f32.xlu0 %v1087
    %v1089 = vpop.xlane.xlu0 %1088
    %v1090 = vstv %s186
    %v1091 = vadd.f32 %v1089, %v1090
    %v1092 = vxor.u32 %v1091, 2147483648
    %v1093 = vmul.f32 %v1092, 1.442695
    %v1094 = vpow.pop %v1093
    %v1095 = vadd.f32 %v1094, 1.0
    %v1096 = vrcp.pop %v1095
    %v1097 = vmul.f32 1.0, %v1096
    %vm1098 = vcmask 7168
    %1099 = vst.msk [vmem:[%s12] sm:$0xff] %vm1098, %v1097
    // Predicated region
    $region116: #{tpu_custom_call.1} parent=1 // pred_check
      _
    $region117: #{tpu_custom_call.1} parent=1 // pred_check_branch
      %1101 = sbr.rel (0) target = $region119
    $region118: #{tpu_custom_call.1} parent=1 // pred_region
      _
    $region119: #{tpu_custom_call.1} parent=1 // pred_fallthru
      _
    // Predicated region
    $region120: #{tpu_custom_call.1} parent=1 // pred_check
      _
    $region121: #{tpu_custom_call.1} parent=1 // pred_check_branch
      %1103 = sbr.rel (0) target = $region123
    $region122: #{tpu_custom_call.1} parent=1 // pred_region
      _
    $region123: #{tpu_custom_call.1} parent=1 // pred_fallthru
      _
    %1104 = vsyncpa [#allocation9], 1
    %1105 = vsyncpa [#allocation10], 1
  %1106 = vsyncmov [#allocation4]
  %s1107 = vpop.sfrf %1106
  %p1108 = scmp.eq.s32.totalorder %s1107, 0
  %p1109 = pneg %p1108
  %1111 = shalt.err (%p1109)
  %s1112 = scalar_lea.sflag [#allocation4], 1
  %1113 = vsyncmov %s1112
  %s1114 = vpop.sfrf %1113
  %p1115 = scmp.eq.s32.totalorder %s1114, 0
  %p1116 = pneg %p1115
  %1118 = shalt.err (%p1116)

</llo_original>
